<compile_context>
chip_gen: v7x
topology: tpu7x:2x2x1
jax: 0.10.0
libtpu: 0.0.40
codegen_flags: <defaults>
</compile_context>

<pallas_src>
import numpy as np
import jax
import jax.numpy as jnp
from jax import lax
from jax.experimental import pallas as pl
from jax.experimental.pallas import tpu as pltpu

J = 17           # joints per frame
JP = 24          # joint-plane rows padded to a sublane-aligned height
NB_LEN = 8       # bones used by lenth_loss / symloss
NB_VLEN = 15     # bones used by v_len_loss
NB = NB_LEN + NB_VLEN    # 23 bones total
NBP = 24         # padded bone-row count (== JP)

# static bone index tables (from the PyTorch module)
LEN_P = (5, 7, 11, 13, 6, 8, 12, 14)
LEN_S = (7, 9, 13, 15, 8, 10, 14, 16)
VLEN_P = (0, 0, 1, 2, 5, 5, 6, 7, 8, 5, 6, 11, 12, 13, 14)
VLEN_S = (1, 2, 3, 4, 6, 7, 8, 9, 10, 11, 12, 13, 14, 15, 16)


def _incidence_matrix_blockdiag():
    """(3*NBP, 3*JP) block-diagonal signed incidence matrix.

    Each (NBP, JP) block maps one coordinate plane to its 23 bone vectors
    (row r: +1 at the parent joint, -1 at the child joint; row 23 is zero pad).
    """
    D = np.zeros((NBP, JP), dtype=np.float32)
    bones = list(zip(LEN_P, LEN_S)) + list(zip(VLEN_P, VLEN_S))
    for r, (pj, sj) in enumerate(bones):
        D[r, pj] += 1.0
        D[r, sj] -= 1.0
    D3 = np.zeros((3 * NBP, 3 * JP), dtype=np.float32)
    for c in range(3):
        D3[c * NBP:(c + 1) * NBP, c * JP:(c + 1) * JP] = D
    return D3


def _loss_kernel(params_ref, d3_ref, bone_gt_ref, pred_ref, gt2d_ref, out_ref):
    B = pred_ref.shape[1]

    p = pred_ref[...]            # (3*JP, B)  coordinate planes x|y|z on sublanes
    g = gt2d_ref[...]            # (2*JP, B)  u|v planes
    D3 = d3_ref[...]             # (3*NBP, 3*JP) block-diagonal incidence matrix
    bone_gt = bone_gt_ref[...]   # (JP, 1)    gt bone lengths in rows 0..7, else 0

    # ---- hoisted SMEM scalars (splat once each) ----
    inv_fx = params_ref[0]
    inv_fy = params_ref[1]
    cx = params_ref[2]
    cy = params_ref[3]
    m00 = params_ref[4]; m01 = params_ref[5]; m02 = params_ref[6]; m03 = params_ref[7]
    m10 = params_ref[8]; m11 = params_ref[9]; m12 = params_ref[10]; m13 = params_ref[11]
    m20 = params_ref[12]; m21 = params_ref[13]; m22 = params_ref[14]; m23 = params_ref[15]

    hi = jax.lax.Precision.HIGHEST

    # ---- all 23 bone vectors for all 3 coordinates: ONE matmul --------------
    bv = jnp.dot(D3, p, preferred_element_type=jnp.float32, precision=hi)  # (72,B)
    bvx = bv[0 * NBP:1 * NBP, :]
    bvy = bv[1 * NBP:2 * NBP, :]
    bvz = bv[2 * NBP:3 * NBP, :]
    bl = jnp.sqrt(bvx * bvx + bvy * bvy + bvz * bvz)          # (NBP, B), row 23 = 0

    # row masks (full-tile compute, mask before the reduction)
    row = lax.broadcasted_iota(jnp.int32, (NBP, B), 0)
    mask_len = row < NB_LEN                                    # rows 0..7
    mask_vlen = jnp.logical_and(row >= NB_LEN, row < NB)       # rows 8..22
    mask_joint = row < J                                       # rows 0..16

    # per-term weights folded with the MSE normalizers (static Python floats)
    w_len = 1.0 / (NB_LEN * B)
    w_sym = 0.002 / (NB_LEN * B)
    w_vlen = 0.002 / (NB_VLEN * B)
    w_ws = 10.0 / (J * B)

    # ---- lenth_loss residual: (bone length - gt)^2 on rows 0..7 -------------
    d_len = bl - bone_gt                                       # (NBP,1) lane-bcast

    # ---- symloss: rows 0..3 = left bones, rows 4..7 = right bones -----------
    bl8 = bl[0:NB_LEN, :]                                      # aligned 8-row slice
    inv8 = pl.reciprocal(bl8, approx=True)                     # EUP slot
    # roll by 4 sublanes pairs each bone with its mirror; same multiset as the
    # reference's concat(l/r, r/l), MSE invariant.
    d_sym = bl8 * pltpu.roll(inv8, shift=4, axis=0) - 1.0

    # ---- v_len_loss: bone length / mean over the 15-bone table --------------
    vsum = jnp.sum(jnp.where(mask_vlen, bl, 0.0), axis=0, keepdims=True)  # (1,B)
    inv_bmean = pl.reciprocal(vsum * (1.0 / NB_VLEN), approx=True)        # EUP slot
    d_vl = bl * inv_bmean - 1.0                                # masked rows dropped

    # ---- unprojectloss on full 24-row planes (mask before reduction) --------
    xc = p[0 * JP:1 * JP, :]
    yc = p[1 * JP:2 * JP, :]
    zc = p[2 * JP:3 * JP, :]
    gx = g[0 * JP:1 * JP, :]
    gy = g[1 * JP:2 * JP, :]
    px = xc * m00 + yc * m01 + zc * m02 + m03
    py = xc * m10 + yc * m11 + zc * m12 + m13
    pz = xc * m20 + yc * m21 + zc * m22 + m23
    vx = (gx - cx) * inv_fx
    vy = (gy - cy) * inv_fy
    c0 = vx * pz - px
    c1 = vy * pz - py
    num = jnp.sqrt(c0 * c0 + c1 * c1)
    den = (vx * vx + vy * vy + 1.0) * (px * px + py * py + pz * pz)
    l_every = num * lax.rsqrt(den)                             # 1 sqrt + 1 rsqrt

    # ---- one combined (24,B) weighted accumulator -> one reduction ----------
    acc = (w_len * jnp.where(mask_len, d_len * d_len, 0.0)
           + w_vlen * jnp.where(mask_vlen, d_vl * d_vl, 0.0)
           + w_ws * jnp.where(mask_joint, l_every, 0.0))
    total = jnp.sum(acc) + w_sym * jnp.sum(d_sym * d_sym)

    # ---- v_loss: temporal second difference directly on the lane axis -------
    if B > 2:
        dd = 0.5 * p[:, 0:B - 2] - p[:, 1:B - 1] + 0.5 * p[:, 2:B]
        total = total + (0.1 / (3.0 * J * (B - 2))) * jnp.sum(dd * dd)
    else:
        total = total + jnp.float32(float("nan"))   # matches reference NaN, B<=2

    out_ref[0, 0] = total


def imgandbone_lossnew(pred_3d_cs, gt_2d, intrinsic, M, bone_lenth):
    pred = pred_3d_cs.reshape(-1, J, 3).astype(jnp.float32)    # (B, 17, 3)
    gt2d = gt_2d.reshape(-1, J, 2).astype(jnp.float32)         # (B, 17, 2)
    B = pred.shape[0]

    # lane-dense layout: features on sublanes (8-aligned 24-row planes),
    # frames on lanes.
    pred_t = jnp.transpose(pred, (2, 1, 0))                    # (3, 17, B)
    pred_t = jnp.pad(pred_t, ((0, 0), (0, JP - J), (0, 0))).reshape(3 * JP, B)
    gt2d_t = jnp.transpose(gt2d, (2, 1, 0))                    # (2, 17, B)
    gt2d_t = jnp.pad(gt2d_t, ((0, 0), (0, JP - J), (0, 0))).reshape(2 * JP, B)

    intrinsic = intrinsic.astype(jnp.float32)
    M = M.astype(jnp.float32)
    params = jnp.concatenate([
        jnp.stack([1.0 / intrinsic[0, 0], 1.0 / intrinsic[1, 1],
                   intrinsic[0, 2], intrinsic[1, 2]]),
        M[:3, :4].reshape(-1),
    ]).astype(jnp.float32)                                     # (16,)

    bone_gt = jnp.zeros((JP, 1), jnp.float32)
    bone_gt = bone_gt.at[:NB_LEN, 0].set(bone_lenth[:NB_LEN].astype(jnp.float32))

    D3 = jnp.asarray(_incidence_matrix_blockdiag())            # (72, 72)

    out = pl.pallas_call(
        _loss_kernel,
        out_shape=jax.ShapeDtypeStruct((1, 1), jnp.float32),
        in_specs=[
            pl.BlockSpec(memory_space=pltpu.MemorySpace.SMEM),   # params (16,)
            pl.BlockSpec(memory_space=pltpu.MemorySpace.VMEM),   # D3 (72,72)
            pl.BlockSpec(memory_space=pltpu.MemorySpace.VMEM),   # bone_gt (24,1)
            pl.BlockSpec(memory_space=pltpu.MemorySpace.VMEM),   # pred (72,B)
            pl.BlockSpec(memory_space=pltpu.MemorySpace.VMEM),   # gt2d (48,B)
        ],
        out_specs=pl.BlockSpec(memory_space=pltpu.MemorySpace.SMEM),
    )(params, D3, bone_gt, pred_t, gt2d_t)
    return out[0, 0]


def _reference(pred, gt2d, intrinsic, M, bone_lenth):
    # plain-JAX mirror of the PyTorch forward, for correctness checking
    x = pred.reshape(-1, J, 3)
    p = np.array(LEN_P)
    s = np.array(LEN_S)
    bl = jnp.linalg.norm(x[:, p] - x[:, s], axis=2)
    loss_ss = jnp.mean((bl - bone_lenth[:8][None, :]) ** 2)
    pred3d = x @ M[:3, :3].T + M[:3, 3]
    vx = (gt2d[:, :, 0] - intrinsic[0, 2]) / intrinsic[0, 0]
    vy = (gt2d[:, :, 1] - intrinsic[1, 2]) / intrinsic[1, 1]
    gt_norm = jnp.sqrt(vx ** 2 + vy ** 2 + 1.0)
    c0 = vx * pred3d[:, :, 2] - pred3d[:, :, 0]
    c1 = vy * pred3d[:, :, 2] - pred3d[:, :, 1]
    d_inplan = jnp.sqrt(c0 ** 2 + c1 ** 2)
    jl = jnp.linalg.norm(pred3d, axis=2)
    loss_ws = jnp.mean(d_inplan / (gt_norm * jl))
    lb = bl[:, :4]
    rb = bl[:, 4:]
    total = jnp.concatenate([lb / rb, rb / lb], axis=1)
    loss_sym = jnp.mean((total - 1.0) ** 2)
    mean_coo = (x[:-2] + x[2:]) / 2.0
    loss_v = jnp.mean((mean_coo - x[1:-1]) ** 2)
    vp = np.array(VLEN_P)
    vs = np.array(VLEN_S)
    vbl = jnp.linalg.norm(x[:, vp] - x[:, vs], axis=2)
    bmean = jnp.mean(vbl, axis=1, keepdims=True)
    loss_vlen = jnp.mean((vbl / bmean - 1.0) ** 2)
    return (loss_ss + 10.0 * loss_ws + 0.002 * loss_sym
            + 0.1 * loss_v + 0.002 * loss_vlen)


if __name__ == "__main__":
    key = jax.random.PRNGKey(0)
    k1, k2, k3 = jax.random.split(key, 3)
    B = 8
    # joints roughly in front of the camera (z ~ 3m)
    pred_3d_cs = (jnp.array([0.0, 0.0, 3.0], dtype=jnp.float32)
                  + 0.3 * jax.random.normal(k1, (B, J, 3))).astype(jnp.float32)
    gt_2d = (jnp.array([320.0, 240.0], dtype=jnp.float32)
             + 60.0 * jax.random.normal(k2, (B, J, 2))).astype(jnp.float32)
    intrinsic = jnp.array([[500.0, 0.0, 320.0],
                           [0.0, 500.0, 240.0],
                           [0.0, 0.0, 1.0]], dtype=jnp.float32)
    M = jnp.array([[1.0, 0.0, 0.0, 0.05],
                   [0.0, 1.0, 0.0, -0.02],
                   [0.0, 0.0, 1.0, 0.10],
                   [0.0, 0.0, 0.0, 1.0]], dtype=jnp.float32)
    bone_lenth = (0.3 + 0.1 * jnp.abs(jax.random.normal(k3, (15,)))
                  ).astype(jnp.float32)

    loss = imgandbone_lossnew(pred_3d_cs, gt_2d, intrinsic, M, bone_lenth)
    loss = jax.block_until_ready(loss)
    ref = jax.block_until_ready(
        _reference(pred_3d_cs, gt_2d, intrinsic, M, bone_lenth))
    if not np.allclose(np.asarray(loss), np.asarray(ref), rtol=1e-3, atol=1e-4):
        raise AssertionError(f"mismatch: kernel={loss} ref={ref}")
    print("KERNEL_OK")
</pallas_src>

<mosaic_0001>
module attributes {stable_mosaic.version = 11 : i64} {
  func.func @_loss_kernel(%arg0: memref<16xf32, #tpu.memory_space<smem>>, %arg1: memref<72x72xf32, #tpu.memory_space<vmem>>, %arg2: memref<24x1xf32, #tpu.memory_space<vmem>>, %arg3: memref<72x8xf32, #tpu.memory_space<vmem>>, %arg4: memref<48x8xf32, #tpu.memory_space<vmem>>, %arg5: memref<1x1xf32, #tpu.memory_space<smem>>) attributes {dimension_semantics = [], scalar_prefetch = 0 : i64, scratch_operands = 0 : i64, tpu.core_type = #tpu.core_type<tc>} {
    %c0 = arith.constant 0 : index
    %c0_0 = arith.constant 0 : index
    %0 = vector.load %arg3[%c0, %c0_0] : memref<72x8xf32, #tpu.memory_space<vmem>>, vector<72x8xf32>
    %c0_1 = arith.constant 0 : index
    %c0_2 = arith.constant 0 : index
    %1 = vector.load %arg4[%c0_1, %c0_2] : memref<48x8xf32, #tpu.memory_space<vmem>>, vector<48x8xf32>
    %c0_3 = arith.constant 0 : index
    %c0_4 = arith.constant 0 : index
    %2 = vector.load %arg1[%c0_3, %c0_4] : memref<72x72xf32, #tpu.memory_space<vmem>>, vector<72x72xf32>
    %c0_5 = arith.constant 0 : index
    %c0_6 = arith.constant 0 : index
    %3 = vector.load %arg2[%c0_5, %c0_6] : memref<24x1xf32, #tpu.memory_space<vmem>>, vector<24x1xf32>
    %c0_7 = arith.constant 0 : index
    %4 = memref.load %arg0[%c0_7] : memref<16xf32, #tpu.memory_space<smem>>
    %c1 = arith.constant 1 : index
    %5 = memref.load %arg0[%c1] : memref<16xf32, #tpu.memory_space<smem>>
    %c2 = arith.constant 2 : index
    %6 = memref.load %arg0[%c2] : memref<16xf32, #tpu.memory_space<smem>>
    %c3 = arith.constant 3 : index
    %7 = memref.load %arg0[%c3] : memref<16xf32, #tpu.memory_space<smem>>
    %c4 = arith.constant 4 : index
    %8 = memref.load %arg0[%c4] : memref<16xf32, #tpu.memory_space<smem>>
    %c5 = arith.constant 5 : index
    %9 = memref.load %arg0[%c5] : memref<16xf32, #tpu.memory_space<smem>>
    %c6 = arith.constant 6 : index
    %10 = memref.load %arg0[%c6] : memref<16xf32, #tpu.memory_space<smem>>
    %c7 = arith.constant 7 : index
    %11 = memref.load %arg0[%c7] : memref<16xf32, #tpu.memory_space<smem>>
    %c8 = arith.constant 8 : index
    %12 = memref.load %arg0[%c8] : memref<16xf32, #tpu.memory_space<smem>>
    %c9 = arith.constant 9 : index
    %13 = memref.load %arg0[%c9] : memref<16xf32, #tpu.memory_space<smem>>
    %c10 = arith.constant 10 : index
    %14 = memref.load %arg0[%c10] : memref<16xf32, #tpu.memory_space<smem>>
    %c11 = arith.constant 11 : index
    %15 = memref.load %arg0[%c11] : memref<16xf32, #tpu.memory_space<smem>>
    %c12 = arith.constant 12 : index
    %16 = memref.load %arg0[%c12] : memref<16xf32, #tpu.memory_space<smem>>
    %c13 = arith.constant 13 : index
    %17 = memref.load %arg0[%c13] : memref<16xf32, #tpu.memory_space<smem>>
    %c14 = arith.constant 14 : index
    %18 = memref.load %arg0[%c14] : memref<16xf32, #tpu.memory_space<smem>>
    %c15 = arith.constant 15 : index
    %19 = memref.load %arg0[%c15] : memref<16xf32, #tpu.memory_space<smem>>
    %cst = arith.constant dense<0.000000e+00> : vector<72x8xf32>
    %20 = tpu.matmul %2, %0, %cst {dimension_numbers = #tpu.dot_dimension_numbers<[1], [0], [0], [1], [0, 0, 1, 1], [], []>, precision = #tpu.contract_precision<fp32>} : vector<72x72xf32>, vector<72x8xf32>, vector<72x8xf32> -> vector<72x8xf32>
    %21 = vector.extract_strided_slice %20 {offsets = [0, 0], sizes = [24, 8], strides = [1, 1]} : vector<72x8xf32> to vector<24x8xf32>
    %22 = vector.extract_strided_slice %20 {offsets = [24, 0], sizes = [24, 8], strides = [1, 1]} : vector<72x8xf32> to vector<24x8xf32>
    %23 = vector.extract_strided_slice %20 {offsets = [48, 0], sizes = [24, 8], strides = [1, 1]} : vector<72x8xf32> to vector<24x8xf32>
    %24 = arith.mulf %21, %21 : vector<24x8xf32>
    %25 = arith.mulf %22, %22 : vector<24x8xf32>
    %26 = arith.addf %24, %25 : vector<24x8xf32>
    %27 = arith.mulf %23, %23 : vector<24x8xf32>
    %28 = arith.addf %26, %27 : vector<24x8xf32>
    %29 = math.sqrt %28 : vector<24x8xf32>
    %30 = tpu.iota {dimensions = array<i32: 0>} : vector<24x8xi32>
    %c8_i32 = arith.constant 8 : i32
    %31 = vector.broadcast %c8_i32 : i32 to vector<24x8xi32>
    %32 = arith.cmpi slt, %30, %31 : vector<24x8xi32>
    %c8_i32_8 = arith.constant 8 : i32
    %33 = vector.broadcast %c8_i32_8 : i32 to vector<24x8xi32>
    %34 = arith.cmpi sge, %30, %33 : vector<24x8xi32>
    %c23_i32 = arith.constant 23 : i32
    %35 = vector.broadcast %c23_i32 : i32 to vector<24x8xi32>
    %36 = arith.cmpi slt, %30, %35 : vector<24x8xi32>
    %37 = arith.andi %34, %36 : vector<24x8xi1>
    %c17_i32 = arith.constant 17 : i32
    %38 = vector.broadcast %c17_i32 : i32 to vector<24x8xi32>
    %39 = arith.cmpi slt, %30, %38 : vector<24x8xi32>
    %40 = vector.broadcast %3 : vector<24x1xf32> to vector<24x8xf32>
    %41 = arith.subf %29, %40 : vector<24x8xf32>
    %42 = vector.extract_strided_slice %29 {offsets = [0, 0], sizes = [8, 8], strides = [1, 1]} : vector<24x8xf32> to vector<8x8xf32>
    %43 = tpu.reciprocal %42 {approx = true} : vector<8x8xf32> -> vector<8x8xf32>
    %c4_i32 = arith.constant 4 : i32
    %44 = tpu.dynamic_rotate %43 by %c4_i32 dim 0 : vector<8x8xf32>, i32 -> vector<8x8xf32>
    %45 = arith.mulf %42, %44 : vector<8x8xf32>
    %cst_9 = arith.constant 1.000000e+00 : f32
    %46 = vector.broadcast %cst_9 : f32 to vector<8x8xf32>
    %47 = arith.subf %45, %46 : vector<8x8xf32>
    %cst_10 = arith.constant 0.000000e+00 : f32
    %48 = vector.broadcast %cst_10 : f32 to vector<24x8xf32>
    %49 = arith.select %37, %29, %48 : vector<24x8xi1>, vector<24x8xf32>
    %cst_11 = arith.constant dense<0.000000e+00> : vector<8xf32>
    %50 = vector.multi_reduction <add>, %49, %cst_11 [0] : vector<24x8xf32> to vector<8xf32>
    %51 = vector.shape_cast %50 : vector<8xf32> to vector<1x8xf32>
    %cst_12 = arith.constant 0.0666666701 : f32
    %52 = vector.broadcast %cst_12 : f32 to vector<1x8xf32>
    %53 = arith.mulf %51, %52 : vector<1x8xf32>
    %54 = tpu.reciprocal %53 {approx = true} : vector<1x8xf32> -> vector<1x8xf32>
    %55 = vector.broadcast %54 : vector<1x8xf32> to vector<24x8xf32>
    %56 = arith.mulf %29, %55 : vector<24x8xf32>
    %cst_13 = arith.constant 1.000000e+00 : f32
    %57 = vector.broadcast %cst_13 : f32 to vector<24x8xf32>
    %58 = arith.subf %56, %57 : vector<24x8xf32>
    %59 = vector.extract_strided_slice %0 {offsets = [0, 0], sizes = [24, 8], strides = [1, 1]} : vector<72x8xf32> to vector<24x8xf32>
    %60 = vector.extract_strided_slice %0 {offsets = [24, 0], sizes = [24, 8], strides = [1, 1]} : vector<72x8xf32> to vector<24x8xf32>
    %61 = vector.extract_strided_slice %0 {offsets = [48, 0], sizes = [24, 8], strides = [1, 1]} : vector<72x8xf32> to vector<24x8xf32>
    %62 = vector.extract_strided_slice %1 {offsets = [0, 0], sizes = [24, 8], strides = [1, 1]} : vector<48x8xf32> to vector<24x8xf32>
    %63 = vector.extract_strided_slice %1 {offsets = [24, 0], sizes = [24, 8], strides = [1, 1]} : vector<48x8xf32> to vector<24x8xf32>
    %64 = vector.broadcast %8 : f32 to vector<24x8xf32>
    %65 = arith.mulf %59, %64 : vector<24x8xf32>
    %66 = vector.broadcast %9 : f32 to vector<24x8xf32>
    %67 = arith.mulf %60, %66 : vector<24x8xf32>
    %68 = arith.addf %65, %67 : vector<24x8xf32>
    %69 = vector.broadcast %10 : f32 to vector<24x8xf32>
    %70 = arith.mulf %61, %69 : vector<24x8xf32>
    %71 = arith.addf %68, %70 : vector<24x8xf32>
    %72 = vector.broadcast %11 : f32 to vector<24x8xf32>
    %73 = arith.addf %71, %72 : vector<24x8xf32>
    %74 = vector.broadcast %12 : f32 to vector<24x8xf32>
    %75 = arith.mulf %59, %74 : vector<24x8xf32>
    %76 = vector.broadcast %13 : f32 to vector<24x8xf32>
    %77 = arith.mulf %60, %76 : vector<24x8xf32>
    %78 = arith.addf %75, %77 : vector<24x8xf32>
    %79 = vector.broadcast %14 : f32 to vector<24x8xf32>
    %80 = arith.mulf %61, %79 : vector<24x8xf32>
    %81 = arith.addf %78, %80 : vector<24x8xf32>
    %82 = vector.broadcast %15 : f32 to vector<24x8xf32>
    %83 = arith.addf %81, %82 : vector<24x8xf32>
    %84 = vector.broadcast %16 : f32 to vector<24x8xf32>
    %85 = arith.mulf %59, %84 : vector<24x8xf32>
    %86 = vector.broadcast %17 : f32 to vector<24x8xf32>
    %87 = arith.mulf %60, %86 : vector<24x8xf32>
    %88 = arith.addf %85, %87 : vector<24x8xf32>
    %89 = vector.broadcast %18 : f32 to vector<24x8xf32>
    %90 = arith.mulf %61, %89 : vector<24x8xf32>
    %91 = arith.addf %88, %90 : vector<24x8xf32>
    %92 = vector.broadcast %19 : f32 to vector<24x8xf32>
    %93 = arith.addf %91, %92 : vector<24x8xf32>
    %94 = vector.broadcast %6 : f32 to vector<24x8xf32>
    %95 = arith.subf %62, %94 : vector<24x8xf32>
    %96 = vector.broadcast %4 : f32 to vector<24x8xf32>
    %97 = arith.mulf %95, %96 : vector<24x8xf32>
    %98 = vector.broadcast %7 : f32 to vector<24x8xf32>
    %99 = arith.subf %63, %98 : vector<24x8xf32>
    %100 = vector.broadcast %5 : f32 to vector<24x8xf32>
    %101 = arith.mulf %99, %100 : vector<24x8xf32>
    %102 = arith.mulf %97, %93 : vector<24x8xf32>
    %103 = arith.subf %102, %73 : vector<24x8xf32>
    %104 = arith.mulf %101, %93 : vector<24x8xf32>
    %105 = arith.subf %104, %83 : vector<24x8xf32>
    %106 = arith.mulf %103, %103 : vector<24x8xf32>
    %107 = arith.mulf %105, %105 : vector<24x8xf32>
    %108 = arith.addf %106, %107 : vector<24x8xf32>
    %109 = math.sqrt %108 : vector<24x8xf32>
    %110 = arith.mulf %97, %97 : vector<24x8xf32>
    %111 = arith.mulf %101, %101 : vector<24x8xf32>
    %112 = arith.addf %110, %111 : vector<24x8xf32>
    %cst_14 = arith.constant 1.000000e+00 : f32
    %113 = vector.broadcast %cst_14 : f32 to vector<24x8xf32>
    %114 = arith.addf %112, %113 : vector<24x8xf32>
    %115 = arith.mulf %73, %73 : vector<24x8xf32>
    %116 = arith.mulf %83, %83 : vector<24x8xf32>
    %117 = arith.addf %115, %116 : vector<24x8xf32>
    %118 = arith.mulf %93, %93 : vector<24x8xf32>
    %119 = arith.addf %117, %118 : vector<24x8xf32>
    %120 = arith.mulf %114, %119 : vector<24x8xf32>
    %121 = math.rsqrt %120 : vector<24x8xf32>
    %122 = arith.mulf %109, %121 : vector<24x8xf32>
    %123 = arith.mulf %41, %41 : vector<24x8xf32>
    %cst_15 = arith.constant 0.000000e+00 : f32
    %124 = vector.broadcast %cst_15 : f32 to vector<24x8xf32>
    %125 = arith.select %32, %123, %124 : vector<24x8xi1>, vector<24x8xf32>
    %cst_16 = arith.constant 1.562500e-02 : f32
    %126 = vector.broadcast %cst_16 : f32 to vector<24x8xf32>
    %127 = arith.mulf %126, %125 : vector<24x8xf32>
    %128 = arith.mulf %58, %58 : vector<24x8xf32>
    %cst_17 = arith.constant 0.000000e+00 : f32
    %129 = vector.broadcast %cst_17 : f32 to vector<24x8xf32>
    %130 = arith.select %37, %128, %129 : vector<24x8xi1>, vector<24x8xf32>
    %cst_18 = arith.constant 1.66666669E-5 : f32
    %131 = vector.broadcast %cst_18 : f32 to vector<24x8xf32>
    %132 = arith.mulf %131, %130 : vector<24x8xf32>
    %133 = arith.addf %127, %132 : vector<24x8xf32>
    %cst_19 = arith.constant 0.000000e+00 : f32
    %134 = vector.broadcast %cst_19 : f32 to vector<24x8xf32>
    %135 = arith.select %39, %122, %134 : vector<24x8xi1>, vector<24x8xf32>
    %cst_20 = arith.constant 0.0735294148 : f32
    %136 = vector.broadcast %cst_20 : f32 to vector<24x8xf32>
    %137 = arith.mulf %136, %135 : vector<24x8xf32>
    %138 = arith.addf %133, %137 : vector<24x8xf32>
    %139 = vector.shape_cast %138 : vector<24x8xf32> to vector<1x24x8xf32>
    %cst_21 = arith.constant dense<0.000000e+00> : vector<1xf32>
    %140 = vector.multi_reduction <add>, %139, %cst_21 [1, 2] : vector<1x24x8xf32> to vector<1xf32>
    %141 = vector.shape_cast %140 : vector<1xf32> to vector<1x1x1xf32>
    %142 = vector.extract %141[0, 0, 0] : f32 from vector<1x1x1xf32>
    %143 = arith.mulf %47, %47 : vector<8x8xf32>
    %144 = vector.shape_cast %143 : vector<8x8xf32> to vector<1x8x8xf32>
    %cst_22 = arith.constant dense<0.000000e+00> : vector<1xf32>
    %145 = vector.multi_reduction <add>, %144, %cst_22 [1, 2] : vector<1x8x8xf32> to vector<1xf32>
    %146 = vector.shape_cast %145 : vector<1xf32> to vector<1x1x1xf32>
    %147 = vector.extract %146[0, 0, 0] : f32 from vector<1x1x1xf32>
    %cst_23 = arith.constant 3.125000e-05 : f32
    %148 = arith.mulf %cst_23, %147 : f32
    %149 = arith.addf %142, %148 : f32
    %150 = vector.extract_strided_slice %0 {offsets = [0, 0], sizes = [72, 6], strides = [1, 1]} : vector<72x8xf32> to vector<72x6xf32>
    %cst_24 = arith.constant 5.000000e-01 : f32
    %151 = vector.broadcast %cst_24 : f32 to vector<72x6xf32>
    %152 = arith.mulf %151, %150 : vector<72x6xf32>
    %153 = vector.extract_strided_slice %0 {offsets = [0, 1], sizes = [72, 6], strides = [1, 1]} : vector<72x8xf32> to vector<72x6xf32>
    %154 = arith.subf %152, %153 : vector<72x6xf32>
    %155 = vector.extract_strided_slice %0 {offsets = [0, 2], sizes = [72, 6], strides = [1, 1]} : vector<72x8xf32> to vector<72x6xf32>
    %cst_25 = arith.constant 5.000000e-01 : f32
    %156 = vector.broadcast %cst_25 : f32 to vector<72x6xf32>
    %157 = arith.mulf %156, %155 : vector<72x6xf32>
    %158 = arith.addf %154, %157 : vector<72x6xf32>
    %159 = arith.mulf %158, %158 : vector<72x6xf32>
    %160 = vector.shape_cast %159 : vector<72x6xf32> to vector<1x72x6xf32>
    %cst_26 = arith.constant dense<0.000000e+00> : vector<1xf32>
    %161 = vector.multi_reduction <add>, %160, %cst_26 [1, 2] : vector<1x72x6xf32> to vector<1xf32>
    %162 = vector.shape_cast %161 : vector<1xf32> to vector<1x1x1xf32>
    %163 = vector.extract %162[0, 0, 0] : f32 from vector<1x1x1xf32>
    %cst_27 = arith.constant 3.26797395E-4 : f32
    %164 = arith.mulf %cst_27, %163 : f32
    %165 = arith.addf %149, %164 : f32
    %c0_28 = arith.constant 0 : index
    %c0_29 = arith.constant 0 : index
    %166 = memref.load %arg5[%c0_28, %c0_29] : memref<1x1xf32, #tpu.memory_space<smem>>
    memref.store %165, %arg5[%c0_28, %c0_29] : memref<1x1xf32, #tpu.memory_space<smem>>
    return
  }
}

</mosaic_0001>

<llo_original>
// kernel: tpu_custom_call.1
$region0: #{tpu_custom_call.1}
  #allocation0 [shape = 'u32[]', space=smem, size = 0x4, offset = 0x4, fixed_abs, tag = 'smem constant byte address 0x4 - core index']
  #allocation1 [shape = 'u32[144,128]{1,0:T(1,128)}', space=vmem, size = 0x12000, scoped, tag = 'internal scratch']
  %s0 = inlined_call_operand.vmem [shape: f32[16], index: 0, kind: input, shape index: {}]
  %s1 = inlined_call_operand.vmem [shape: f32[72,72], index: 1, kind: input, shape index: {}]
  %s2 = inlined_call_operand.vmem [shape: f32[24,1], index: 2, kind: input, shape index: {}]
  %s3 = inlined_call_operand.vmem [shape: f32[72,8], index: 3, kind: input, shape index: {}]
  %s4 = inlined_call_operand.vmem [shape: f32[48,8], index: 4, kind: input, shape index: {}]
  %s5 = inlined_call_operand.hbm [shape: f32[1,1], index: 5, kind: output, shape index: {}]
  %s6 = sld [smem:[#allocation0]]
  $region34: #{tpu_custom_call.1} parent=0
    _
  %s8 = ssub.s32 1, %s6
  %s9 = scalar_select 0, %s8, %s6
  $region1: #{tpu_custom_call.1} parent=0
    #allocation2 [shape = 'u8[512]{0}', space=smem, size = 0x200, scoped, tag = 'input window, operand 0, single buffered']
    #allocation3 [shape = 's32[1]{0}', space=sflag, size = 0x4, scoped, tag = 'scoped memory for tpu_custom_call.1']
    #allocation4 [shape = 's32[1]{0}', space=sflag, size = 0x4, scoped, tag = 'scoped memory for tpu_custom_call.1']
    #allocation5 [shape = 'u8[512]{0}', space=smem, size = 0x200, scoped, tag = 'output window, operand 0, single buffered']
    %10 = vsyncpa [#allocation4], 0
    %11 = vsyncpa [#allocation3], 0
    // Predicated region
    $region2: #{tpu_custom_call.1} parent=1 // pred_check
      _
    $region3: #{tpu_custom_call.1} parent=1 // pred_check_branch
      %13 = sbr.rel (0) target = $region5
    $region4: #{tpu_custom_call.1} parent=1 // pred_region
      %s15 = ssub.s32 16, 16
      %16 = vsyncadd [#allocation4], %s15
      %s18 = sshll.u32 %s0, 4
      %s19 = int_to_ptr.vmem [resolvable:$true] %s18
      %21 = dma.vmem_to_smem %s19, 16, [#allocation2], [#allocation4]
    $region5: #{tpu_custom_call.1} parent=1 // pred_fallthru
      _
    // Predicated region
    $region6: #{tpu_custom_call.1} parent=1 // pred_check
      _
    $region7: #{tpu_custom_call.1} parent=1 // pred_check_branch
      %23 = sbr.rel (0) target = $region9
    $region8: #{tpu_custom_call.1} parent=1 // pred_region
      _
    $region9: #{tpu_custom_call.1} parent=1 // pred_fallthru
      _
    // Predicated region
    $region10: #{tpu_custom_call.1} parent=1 // pred_check
      _
    $region11: #{tpu_custom_call.1} parent=1 // pred_check_branch
      %25 = sbr.rel (0) target = $region13
    $region12: #{tpu_custom_call.1} parent=1 // pred_region
      _
    $region13: #{tpu_custom_call.1} parent=1 // pred_fallthru
      _
    // Predicated region
    $region14: #{tpu_custom_call.1} parent=1 // pred_check
      _
    $region15: #{tpu_custom_call.1} parent=1 // pred_check_branch
      %27 = sbr.rel (0) target = $region17
    $region16: #{tpu_custom_call.1} parent=1 // pred_region
      _
    $region17: #{tpu_custom_call.1} parent=1 // pred_fallthru
      _
    // Predicated region
    $region18: #{tpu_custom_call.1} parent=1 // pred_check
      _
    $region19: #{tpu_custom_call.1} parent=1 // pred_check_branch
      %29 = sbr.rel (0) target = $region21
    $region20: #{tpu_custom_call.1} parent=1 // pred_region
      _
    $region21: #{tpu_custom_call.1} parent=1 // pred_fallthru
      _
    // Predicated region
    $region22: #{tpu_custom_call.1} parent=1 // pred_check
      _
    $region23: #{tpu_custom_call.1} parent=1 // pred_check_branch
      %31 = sbr.rel (0) target = $region25
    $region24: #{tpu_custom_call.1} parent=1 // pred_region
      %32 = dma.done [#allocation4], 16
    $region25: #{tpu_custom_call.1} parent=1 // pred_fallthru
      _
    %33 = sfence
    %v34 = vld [vmem:[%s3] sm:$0xff]
    %v35 = vld [vmem:[%s3 + $0x8] sm:$0xff]
    %v36 = vld [vmem:[%s3 + $0x10] sm:$0xff]
    %v37 = vld [vmem:[%s3 + $0x18] sm:$0xff]
    %v38 = vld [vmem:[%s3 + $0x20] sm:$0xff]
    %v39 = vld [vmem:[%s3 + $0x28] sm:$0xff]
    %v40 = vld [vmem:[%s3 + $0x30] sm:$0xff]
    %v41 = vld [vmem:[%s3 + $0x38] sm:$0xff]
    %v42 = vld [vmem:[%s3 + $0x40] sm:$0xff]
    %v43 = vld [vmem:[%s4] sm:$0xff]
    %v44 = vld [vmem:[%s4 + $0x8] sm:$0xff]
    %v45 = vld [vmem:[%s4 + $0x10] sm:$0xff]
    %v46 = vld [vmem:[%s4 + $0x18] sm:$0xff]
    %v47 = vld [vmem:[%s4 + $0x20] sm:$0xff]
    %v48 = vld [vmem:[%s4 + $0x28] sm:$0xff]
    %v49 = vld [vmem:[%s1] sm:$0xff]
    %v50 = vld [vmem:[%s1 + $0x8] sm:$0xff]
    %v51 = vld [vmem:[%s1 + $0x10] sm:$0xff]
    %v52 = vld [vmem:[%s1 + $0x18] sm:$0xff]
    %v53 = vld [vmem:[%s1 + $0x20] sm:$0xff]
    %v54 = vld [vmem:[%s1 + $0x28] sm:$0xff]
    %v55 = vld [vmem:[%s1 + $0x30] sm:$0xff]
    %v56 = vld [vmem:[%s1 + $0x38] sm:$0xff]
    %v57 = vld [vmem:[%s1 + $0x40] sm:$0xff]
    %v58 = vld [vmem:[%s2] sm:$0xff]
    %v59 = vld [vmem:[%s2 + $0x8] sm:$0xff]
    %v60 = vld [vmem:[%s2 + $0x10] sm:$0xff]
    %s61 = sld [smem:[#allocation2]]
    %s62 = sld [smem:[#allocation2 + $0x1]]
    %s63 = sld [smem:[#allocation2 + $0x2]]
    %s64 = sld [smem:[#allocation2 + $0x3]]
    %s65 = sld [smem:[#allocation2 + $0x4]]
    %s66 = sld [smem:[#allocation2 + $0x5]]
    %s67 = sld [smem:[#allocation2 + $0x6]]
    %s68 = sld [smem:[#allocation2 + $0x7]]
    %s69 = sld [smem:[#allocation2 + $0x8]]
    %s70 = sld [smem:[#allocation2 + $0x9]]
    %s71 = sld [smem:[#allocation2 + $0xa]]
    %s72 = sld [smem:[#allocation2 + $0xb]]
    %s73 = sld [smem:[#allocation2 + $0xc]]
    %s74 = sld [smem:[#allocation2 + $0xd]]
    %s75 = sld [smem:[#allocation2 + $0xe]]
    %s76 = sld [smem:[#allocation2 + $0xf]]
    %vm77 = vcmask 588800
    %v79 = vsel %vm77, %v49, 0
    %v82 = vsel %vm77, %v50, 0
    %v85 = vsel %vm77, %v51, 0
    %v88 = vsel %vm77, %v52, 0
    %v91 = vsel %vm77, %v53, 0
    %v94 = vsel %vm77, %v54, 0
    %v97 = vsel %vm77, %v55, 0
    %v100 = vsel %vm77, %v56, 0
    %v103 = vsel %vm77, %v57, 0
    %105 = vmatprep.subr.mxu0 0.0
    %v106 = vand.u32 %v34, 4294901760
    %107 = vmatpush1.msra.mxu0 %v106
    %108 = vmatprep.subr.mxu0 0.0
    %v109 = vand.u32 %v35, 4294901760
    %110 = vmatpush1.msra.mxu0 %v109
    %111 = vmatprep.subr.mxu0 0.0
    %v112 = vand.u32 %v36, 4294901760
    %113 = vmatpush1.msra.mxu0 %v112
    %114 = vmatprep.subr.mxu0 0.0
    %v115 = vand.u32 %v37, 4294901760
    %116 = vmatpush1.msra.mxu0 %v115
    %117 = vmatprep.subr.mxu0 0.0
    %v118 = vand.u32 %v38, 4294901760
    %119 = vmatpush1.msra.mxu0 %v118
    %120 = vmatprep.subr.mxu0 0.0
    %v121 = vand.u32 %v39, 4294901760
    %122 = vmatpush1.msra.mxu0 %v121
    %123 = vmatprep.subr.mxu0 0.0
    %v124 = vand.u32 %v40, 4294901760
    %125 = vmatpush1.msra.mxu0 %v124
    %126 = vmatprep.subr.mxu0 0.0
    %v127 = vand.u32 %v41, 4294901760
    %128 = vmatpush1.msra.mxu0 %v127
    %129 = vmatprep.subr.mxu0 0.0
    %v130 = vand.u32 %v42, 4294901760
    %131 = vmatpush1.msra.mxu0 %v130
    %132 = vmatprep.subr.mxu0 0.0
    %133 = vmatpush1.msra.mxu0 0.0
    %134 = vmatprep.subr.mxu0 0.0
    %135 = vmatpush1.msra.mxu0 0.0
    %136 = vmatprep.subr.mxu0 0.0
    %137 = vmatpush1.msra.mxu0 0.0
    %138 = vmatprep.subr.mxu0 0.0
    %139 = vmatpush1.msra.mxu0 0.0
    %140 = vmatprep.subr.mxu0 0.0
    %141 = vmatpush1.msra.mxu0 0.0
    %142 = vmatprep.subr.mxu0 0.0
    %143 = vmatpush1.msra.mxu0 0.0
    %144 = vmatprep.subr.mxu0 0.0
    %145 = vmatpush1.msra.mxu0 0.0
    %146 = vmatprep.subr.mxu0 0.0
    %147 = vmatpush1.msra.mxu0 0.0
    %148 = vmatprep.subr.mxu0 0.0
    %149 = vmatpush1.msra.mxu0 0.0
    %150 = vmatprep.subr.mxu0 0.0
    %151 = vmatpush1.msra.mxu0 0.0
    %152 = vmatprep.subr.mxu0 0.0
    %153 = vmatpush1.msra.mxu0 0.0
    %154 = vmatprep.subr.mxu0 0.0
    %155 = vmatpush1.msra.mxu0 0.0
    %156 = vmatprep.subr.mxu0 0.0
    %157 = vmatpush1.msra.mxu0 0.0
    %158 = vmatprep.subr.mxu0 0.0
    %159 = vmatpush1.msra.mxu0 0.0
    %160 = vmatprep.subr.mxu0 0.0
    %161 = vmatpush1.msra.mxu0 0.0
    %162 = vmatprep.subr.mxu0 0.0
    %163 = vmatpush1.msra.mxu0 0.0
    %164 = vmatprep.subr.mxu0 0.0
    %165 = vmatpush1.msra.mxu0 0.0
    %166 = vmatprep.subr.mxu0 0.0
    %167 = vmatpush1.msra.mxu0 0.0
    %168 = vmatprep.subr.mxu0 0.0
    %169 = vmatpush1.msra.mxu0 0.0
    %170 = vmatprep.subr.mxu0 0.0
    %171 = vmatpush1.msra.mxu0 0.0
    %172 = vmatprep.subr.mxu0 0.0
    %173 = vmatpush1.msra.mxu0 0.0
    %174 = vmatprep.subr.mxu0 0.0
    %175 = vmatpush1.msra.mxu0 0.0
    %176 = vmatprep.subr.mxu0 0.0
    %177 = vmatpush1.msra.mxu0 0.0
    %178 = vmatprep.mubr.f32.mxu0 0.0
    %v179 = vand.u32 %v79, 4294901760
    %v180 = vsub.f32 %v79, %v179
    %v181 = vand.u32 %v180, 4294901760
    %v182 = vsub.f32 %v180, %v181
    %v183 = vand.u32 %v182, 4294901760
    %184 = vmatmul.mubr.f32.gmra.mrb[0].mxu0 %v183
    %v185 = vpop.f32.mrb[0].mxu0
    %v186 = vadd.f32 0.0, %v185
    %v187 = vpop.f32.mrb[0].mxu0
    %188 = vmatprep.mubr.f32.mxu0 0.0
    %v189 = vand.u32 %v82, 4294901760
    %v190 = vsub.f32 %v82, %v189
    %v191 = vand.u32 %v190, 4294901760
    %v192 = vsub.f32 %v190, %v191
    %v193 = vand.u32 %v192, 4294901760
    %194 = vmatmul.mubr.f32.gmra.mrb[0].mxu0 %v193
    %v195 = vpop.f32.mrb[0].mxu0
    %v196 = vadd.f32 0.0, %v195
    %v197 = vpop.f32.mrb[0].mxu0
    %198 = vmatprep.mubr.f32.mxu0 0.0
    %v199 = vand.u32 %v85, 4294901760
    %v200 = vsub.f32 %v85, %v199
    %v201 = vand.u32 %v200, 4294901760
    %v202 = vsub.f32 %v200, %v201
    %v203 = vand.u32 %v202, 4294901760
    %204 = vmatmul.mubr.f32.gmra.mrb[0].mxu0 %v203
    %v205 = vpop.f32.mrb[0].mxu0
    %v206 = vadd.f32 0.0, %v205
    %v207 = vpop.f32.mrb[0].mxu0
    %208 = vmatprep.mubr.f32.mxu0 0.0
    %v209 = vand.u32 %v88, 4294901760
    %v210 = vsub.f32 %v88, %v209
    %v211 = vand.u32 %v210, 4294901760
    %v212 = vsub.f32 %v210, %v211
    %v213 = vand.u32 %v212, 4294901760
    %214 = vmatmul.mubr.f32.gmra.mrb[0].mxu0 %v213
    %v215 = vpop.f32.mrb[0].mxu0
    %v216 = vadd.f32 0.0, %v215
    %v217 = vpop.f32.mrb[0].mxu0
    %218 = vmatprep.mubr.f32.mxu0 0.0
    %v219 = vand.u32 %v91, 4294901760
    %v220 = vsub.f32 %v91, %v219
    %v221 = vand.u32 %v220, 4294901760
    %v222 = vsub.f32 %v220, %v221
    %v223 = vand.u32 %v222, 4294901760
    %224 = vmatmul.mubr.f32.gmra.mrb[0].mxu0 %v223
    %v225 = vpop.f32.mrb[0].mxu0
    %v226 = vadd.f32 0.0, %v225
    %v227 = vpop.f32.mrb[0].mxu0
    %228 = vmatprep.mubr.f32.mxu0 0.0
    %v229 = vand.u32 %v94, 4294901760
    %v230 = vsub.f32 %v94, %v229
    %v231 = vand.u32 %v230, 4294901760
    %v232 = vsub.f32 %v230, %v231
    %v233 = vand.u32 %v232, 4294901760
    %234 = vmatmul.mubr.f32.gmra.mrb[0].mxu0 %v233
    %v235 = vpop.f32.mrb[0].mxu0
    %v236 = vadd.f32 0.0, %v235
    %v237 = vpop.f32.mrb[0].mxu0
    %238 = vmatprep.mubr.f32.mxu0 0.0
    %v239 = vand.u32 %v97, 4294901760
    %v240 = vsub.f32 %v97, %v239
    %v241 = vand.u32 %v240, 4294901760
    %v242 = vsub.f32 %v240, %v241
    %v243 = vand.u32 %v242, 4294901760
    %244 = vmatmul.mubr.f32.gmra.mrb[0].mxu0 %v243
    %v245 = vpop.f32.mrb[0].mxu0
    %v246 = vadd.f32 0.0, %v245
    %v247 = vpop.f32.mrb[0].mxu0
    %248 = vmatprep.mubr.f32.mxu0 0.0
    %v249 = vand.u32 %v100, 4294901760
    %v250 = vsub.f32 %v100, %v249
    %v251 = vand.u32 %v250, 4294901760
    %v252 = vsub.f32 %v250, %v251
    %v253 = vand.u32 %v252, 4294901760
    %254 = vmatmul.mubr.f32.gmra.mrb[0].mxu0 %v253
    %v255 = vpop.f32.mrb[0].mxu0
    %v256 = vadd.f32 0.0, %v255
    %v257 = vpop.f32.mrb[0].mxu0
    %258 = vmatprep.mubr.f32.mxu0 0.0
    %v259 = vand.u32 %v103, 4294901760
    %v260 = vsub.f32 %v103, %v259
    %v261 = vand.u32 %v260, 4294901760
    %v262 = vsub.f32 %v260, %v261
    %v263 = vand.u32 %v262, 4294901760
    %264 = vmatmul.mubr.f32.gmra.mrb[0].mxu0 %v263
    %v265 = vpop.f32.mrb[0].mxu0
    %v266 = vadd.f32 0.0, %v265
    %v267 = vpop.f32.mrb[0].mxu0
    %268 = vdwg.mxu0
    %269 = vmatprep.subr.mxu0 0.0
    %v270 = vand.u32 %v34, 4294901760
    %v271 = vsub.f32 %v34, %v270
    %v272 = vand.u32 %v271, 4294901760
    %v273 = vsub.f32 %v271, %v272
    %v274 = vand.u32 %v273, 4294901760
    %275 = vmatpush1.msra.mxu0 %v274
    %276 = vmatprep.subr.mxu0 0.0
    %v277 = vand.u32 %v35, 4294901760
    %v278 = vsub.f32 %v35, %v277
    %v279 = vand.u32 %v278, 4294901760
    %v280 = vsub.f32 %v278, %v279
    %v281 = vand.u32 %v280, 4294901760
    %282 = vmatpush1.msra.mxu0 %v281
    %283 = vmatprep.subr.mxu0 0.0
    %v284 = vand.u32 %v36, 4294901760
    %v285 = vsub.f32 %v36, %v284
    %v286 = vand.u32 %v285, 4294901760
    %v287 = vsub.f32 %v285, %v286
    %v288 = vand.u32 %v287, 4294901760
    %289 = vmatpush1.msra.mxu0 %v288
    %290 = vmatprep.subr.mxu0 0.0
    %v291 = vand.u32 %v37, 4294901760
    %v292 = vsub.f32 %v37, %v291
    %v293 = vand.u32 %v292, 4294901760
    %v294 = vsub.f32 %v292, %v293
    %v295 = vand.u32 %v294, 4294901760
    %296 = vmatpush1.msra.mxu0 %v295
    %297 = vmatprep.subr.mxu0 0.0
    %v298 = vand.u32 %v38, 4294901760
    %v299 = vsub.f32 %v38, %v298
    %v300 = vand.u32 %v299, 4294901760
    %v301 = vsub.f32 %v299, %v300
    %v302 = vand.u32 %v301, 4294901760
    %303 = vmatpush1.msra.mxu0 %v302
    %304 = vmatprep.subr.mxu0 0.0
    %v305 = vand.u32 %v39, 4294901760
    %v306 = vsub.f32 %v39, %v305
    %v307 = vand.u32 %v306, 4294901760
    %v308 = vsub.f32 %v306, %v307
    %v309 = vand.u32 %v308, 4294901760
    %310 = vmatpush1.msra.mxu0 %v309
    %311 = vmatprep.subr.mxu0 0.0
    %v312 = vand.u32 %v40, 4294901760
    %v313 = vsub.f32 %v40, %v312
    %v314 = vand.u32 %v313, 4294901760
    %v315 = vsub.f32 %v313, %v314
    %v316 = vand.u32 %v315, 4294901760
    %317 = vmatpush1.msra.mxu0 %v316
    %318 = vmatprep.subr.mxu0 0.0
    %v319 = vand.u32 %v41, 4294901760
    %v320 = vsub.f32 %v41, %v319
    %v321 = vand.u32 %v320, 4294901760
    %v322 = vsub.f32 %v320, %v321
    %v323 = vand.u32 %v322, 4294901760
    %324 = vmatpush1.msra.mxu0 %v323
    %325 = vmatprep.subr.mxu0 0.0
    %v326 = vand.u32 %v42, 4294901760
    %v327 = vsub.f32 %v42, %v326
    %v328 = vand.u32 %v327, 4294901760
    %v329 = vsub.f32 %v327, %v328
    %v330 = vand.u32 %v329, 4294901760
    %331 = vmatpush1.msra.mxu0 %v330
    %332 = vmatprep.subr.mxu0 0.0
    %333 = vmatpush1.msra.mxu0 0.0
    %334 = vmatprep.subr.mxu0 0.0
    %335 = vmatpush1.msra.mxu0 0.0
    %336 = vmatprep.subr.mxu0 0.0
    %337 = vmatpush1.msra.mxu0 0.0
    %338 = vmatprep.subr.mxu0 0.0
    %339 = vmatpush1.msra.mxu0 0.0
    %340 = vmatprep.subr.mxu0 0.0
    %341 = vmatpush1.msra.mxu0 0.0
    %342 = vmatprep.subr.mxu0 0.0
    %343 = vmatpush1.msra.mxu0 0.0
    %344 = vmatprep.subr.mxu0 0.0
    %345 = vmatpush1.msra.mxu0 0.0
    %346 = vmatprep.subr.mxu0 0.0
    %347 = vmatpush1.msra.mxu0 0.0
    %348 = vmatprep.subr.mxu0 0.0
    %349 = vmatpush1.msra.mxu0 0.0
    %350 = vmatprep.subr.mxu0 0.0
    %351 = vmatpush1.msra.mxu0 0.0
    %352 = vmatprep.subr.mxu0 0.0
    %353 = vmatpush1.msra.mxu0 0.0
    %354 = vmatprep.subr.mxu0 0.0
    %355 = vmatpush1.msra.mxu0 0.0
    %356 = vmatprep.subr.mxu0 0.0
    %357 = vmatpush1.msra.mxu0 0.0
    %358 = vmatprep.subr.mxu0 0.0
    %359 = vmatpush1.msra.mxu0 0.0
    %360 = vmatprep.subr.mxu0 0.0
    %361 = vmatpush1.msra.mxu0 0.0
    %362 = vmatprep.subr.mxu0 0.0
    %363 = vmatpush1.msra.mxu0 0.0
    %364 = vmatprep.subr.mxu0 0.0
    %365 = vmatpush1.msra.mxu0 0.0
    %366 = vmatprep.subr.mxu0 0.0
    %367 = vmatpush1.msra.mxu0 0.0
    %368 = vmatprep.subr.mxu0 0.0
    %369 = vmatpush1.msra.mxu0 0.0
    %370 = vmatprep.subr.mxu0 0.0
    %371 = vmatpush1.msra.mxu0 0.0
    %372 = vmatprep.subr.mxu0 0.0
    %373 = vmatpush1.msra.mxu0 0.0
    %374 = vmatprep.subr.mxu0 0.0
    %375 = vmatpush1.msra.mxu0 0.0
    %376 = vmatprep.subr.mxu0 0.0
    %377 = vmatpush1.msra.mxu0 0.0
    %378 = vmatprep.mubr.f32.mxu0 0.0
    %v379 = vand.u32 %v79, 4294901760
    %380 = vmatmul.mubr.f32.gmra.mrb[0].mxu0 %v379
    %v381 = vpop.f32.mrb[0].mxu0
    %v382 = vadd.f32 %v186, %v381
    %v383 = vpop.f32.mrb[0].mxu0
    %384 = vmatprep.mubr.f32.mxu0 0.0
    %v385 = vand.u32 %v82, 4294901760
    %386 = vmatmul.mubr.f32.gmra.mrb[0].mxu0 %v385
    %v387 = vpop.f32.mrb[0].mxu0
    %v388 = vadd.f32 %v196, %v387
    %v389 = vpop.f32.mrb[0].mxu0
    %390 = vmatprep.mubr.f32.mxu0 0.0
    %v391 = vand.u32 %v85, 4294901760
    %392 = vmatmul.mubr.f32.gmra.mrb[0].mxu0 %v391
    %v393 = vpop.f32.mrb[0].mxu0
    %v394 = vadd.f32 %v206, %v393
    %v395 = vpop.f32.mrb[0].mxu0
    %396 = vmatprep.mubr.f32.mxu0 0.0
    %v397 = vand.u32 %v88, 4294901760
    %398 = vmatmul.mubr.f32.gmra.mrb[0].mxu0 %v397
    %v399 = vpop.f32.mrb[0].mxu0
    %v400 = vadd.f32 %v216, %v399
    %v401 = vpop.f32.mrb[0].mxu0
    %402 = vmatprep.mubr.f32.mxu0 0.0
    %v403 = vand.u32 %v91, 4294901760
    %404 = vmatmul.mubr.f32.gmra.mrb[0].mxu0 %v403
    %v405 = vpop.f32.mrb[0].mxu0
    %v406 = vadd.f32 %v226, %v405
    %v407 = vpop.f32.mrb[0].mxu0
    %408 = vmatprep.mubr.f32.mxu0 0.0
    %v409 = vand.u32 %v94, 4294901760
    %410 = vmatmul.mubr.f32.gmra.mrb[0].mxu0 %v409
    %v411 = vpop.f32.mrb[0].mxu0
    %v412 = vadd.f32 %v236, %v411
    %v413 = vpop.f32.mrb[0].mxu0
    %414 = vmatprep.mubr.f32.mxu0 0.0
    %v415 = vand.u32 %v97, 4294901760
    %416 = vmatmul.mubr.f32.gmra.mrb[0].mxu0 %v415
    %v417 = vpop.f32.mrb[0].mxu0
    %v418 = vadd.f32 %v246, %v417
    %v419 = vpop.f32.mrb[0].mxu0
    %420 = vmatprep.mubr.f32.mxu0 0.0
    %v421 = vand.u32 %v100, 4294901760
    %422 = vmatmul.mubr.f32.gmra.mrb[0].mxu0 %v421
    %v423 = vpop.f32.mrb[0].mxu0
    %v424 = vadd.f32 %v256, %v423
    %v425 = vpop.f32.mrb[0].mxu0
    %426 = vmatprep.mubr.f32.mxu0 0.0
    %v427 = vand.u32 %v103, 4294901760
    %428 = vmatmul.mubr.f32.gmra.mrb[0].mxu0 %v427
    %v429 = vpop.f32.mrb[0].mxu0
    %v430 = vadd.f32 %v266, %v429
    %v431 = vpop.f32.mrb[0].mxu0
    %432 = vdwg.mxu0
    %433 = vmatprep.subr.mxu0 0.0
    %v434 = vand.u32 %v34, 4294901760
    %v435 = vsub.f32 %v34, %v434
    %436 = vmatpush1.msra.mxu0 %v435
    %437 = vmatprep.subr.mxu0 0.0
    %v438 = vand.u32 %v35, 4294901760
    %v439 = vsub.f32 %v35, %v438
    %440 = vmatpush1.msra.mxu0 %v439
    %441 = vmatprep.subr.mxu0 0.0
    %v442 = vand.u32 %v36, 4294901760
    %v443 = vsub.f32 %v36, %v442
    %444 = vmatpush1.msra.mxu0 %v443
    %445 = vmatprep.subr.mxu0 0.0
    %v446 = vand.u32 %v37, 4294901760
    %v447 = vsub.f32 %v37, %v446
    %448 = vmatpush1.msra.mxu0 %v447
    %449 = vmatprep.subr.mxu0 0.0
    %v450 = vand.u32 %v38, 4294901760
    %v451 = vsub.f32 %v38, %v450
    %452 = vmatpush1.msra.mxu0 %v451
    %453 = vmatprep.subr.mxu0 0.0
    %v454 = vand.u32 %v39, 4294901760
    %v455 = vsub.f32 %v39, %v454
    %456 = vmatpush1.msra.mxu0 %v455
    %457 = vmatprep.subr.mxu0 0.0
    %v458 = vand.u32 %v40, 4294901760
    %v459 = vsub.f32 %v40, %v458
    %460 = vmatpush1.msra.mxu0 %v459
    %461 = vmatprep.subr.mxu0 0.0
    %v462 = vand.u32 %v41, 4294901760
    %v463 = vsub.f32 %v41, %v462
    %464 = vmatpush1.msra.mxu0 %v463
    %465 = vmatprep.subr.mxu0 0.0
    %v466 = vand.u32 %v42, 4294901760
    %v467 = vsub.f32 %v42, %v466
    %468 = vmatpush1.msra.mxu0 %v467
    %469 = vmatprep.subr.mxu0 0.0
    %470 = vmatpush1.msra.mxu0 0.0
    %471 = vmatprep.subr.mxu0 0.0
    %472 = vmatpush1.msra.mxu0 0.0
    %473 = vmatprep.subr.mxu0 0.0
    %474 = vmatpush1.msra.mxu0 0.0
    %475 = vmatprep.subr.mxu0 0.0
    %476 = vmatpush1.msra.mxu0 0.0
    %477 = vmatprep.subr.mxu0 0.0
    %478 = vmatpush1.msra.mxu0 0.0
    %479 = vmatprep.subr.mxu0 0.0
    %480 = vmatpush1.msra.mxu0 0.0
    %481 = vmatprep.subr.mxu0 0.0
    %482 = vmatpush1.msra.mxu0 0.0
    %483 = vmatprep.subr.mxu0 0.0
    %484 = vmatpush1.msra.mxu0 0.0
    %485 = vmatprep.subr.mxu0 0.0
    %486 = vmatpush1.msra.mxu0 0.0
    %487 = vmatprep.subr.mxu0 0.0
    %488 = vmatpush1.msra.mxu0 0.0
    %489 = vmatprep.subr.mxu0 0.0
    %490 = vmatpush1.msra.mxu0 0.0
    %491 = vmatprep.subr.mxu0 0.0
    %492 = vmatpush1.msra.mxu0 0.0
    %493 = vmatprep.subr.mxu0 0.0
    %494 = vmatpush1.msra.mxu0 0.0
    %495 = vmatprep.subr.mxu0 0.0
    %496 = vmatpush1.msra.mxu0 0.0
    %497 = vmatprep.subr.mxu0 0.0
    %498 = vmatpush1.msra.mxu0 0.0
    %499 = vmatprep.subr.mxu0 0.0
    %500 = vmatpush1.msra.mxu0 0.0
    %501 = vmatprep.subr.mxu0 0.0
    %502 = vmatpush1.msra.mxu0 0.0
    %503 = vmatprep.subr.mxu0 0.0
    %504 = vmatpush1.msra.mxu0 0.0
    %505 = vmatprep.subr.mxu0 0.0
    %506 = vmatpush1.msra.mxu0 0.0
    %507 = vmatprep.subr.mxu0 0.0
    %508 = vmatpush1.msra.mxu0 0.0
    %509 = vmatprep.subr.mxu0 0.0
    %510 = vmatpush1.msra.mxu0 0.0
    %511 = vmatprep.subr.mxu0 0.0
    %512 = vmatpush1.msra.mxu0 0.0
    %513 = vmatprep.subr.mxu0 0.0
    %514 = vmatpush1.msra.mxu0 0.0
    %515 = vmatprep.mubr.f32.mxu0 0.0
    %v516 = vand.u32 %v79, 4294901760
    %v517 = vsub.f32 %v79, %v516
    %518 = vmatmul.mubr.f32.gmra.mrb[0].mxu0 %v517
    %v519 = vpop.f32.mrb[0].mxu0
    %v520 = vadd.f32 %v382, %v519
    %v521 = vpop.f32.mrb[0].mxu0
    %522 = vmatprep.mubr.f32.mxu0 0.0
    %v523 = vand.u32 %v82, 4294901760
    %v524 = vsub.f32 %v82, %v523
    %525 = vmatmul.mubr.f32.gmra.mrb[0].mxu0 %v524
    %v526 = vpop.f32.mrb[0].mxu0
    %v527 = vadd.f32 %v388, %v526
    %v528 = vpop.f32.mrb[0].mxu0
    %529 = vmatprep.mubr.f32.mxu0 0.0
    %v530 = vand.u32 %v85, 4294901760
    %v531 = vsub.f32 %v85, %v530
    %532 = vmatmul.mubr.f32.gmra.mrb[0].mxu0 %v531
    %v533 = vpop.f32.mrb[0].mxu0
    %v534 = vadd.f32 %v394, %v533
    %v535 = vpop.f32.mrb[0].mxu0
    %536 = vmatprep.mubr.f32.mxu0 0.0
    %v537 = vand.u32 %v88, 4294901760
    %v538 = vsub.f32 %v88, %v537
    %539 = vmatmul.mubr.f32.gmra.mrb[0].mxu0 %v538
    %v540 = vpop.f32.mrb[0].mxu0
    %v541 = vadd.f32 %v400, %v540
    %v542 = vpop.f32.mrb[0].mxu0
    %543 = vmatprep.mubr.f32.mxu0 0.0
    %v544 = vand.u32 %v91, 4294901760
    %v545 = vsub.f32 %v91, %v544
    %546 = vmatmul.mubr.f32.gmra.mrb[0].mxu0 %v545
    %v547 = vpop.f32.mrb[0].mxu0
    %v548 = vadd.f32 %v406, %v547
    %v549 = vpop.f32.mrb[0].mxu0
    %550 = vmatprep.mubr.f32.mxu0 0.0
    %v551 = vand.u32 %v94, 4294901760
    %v552 = vsub.f32 %v94, %v551
    %553 = vmatmul.mubr.f32.gmra.mrb[0].mxu0 %v552
    %v554 = vpop.f32.mrb[0].mxu0
    %v555 = vadd.f32 %v412, %v554
    %v556 = vpop.f32.mrb[0].mxu0
    %557 = vmatprep.mubr.f32.mxu0 0.0
    %v558 = vand.u32 %v97, 4294901760
    %v559 = vsub.f32 %v97, %v558
    %560 = vmatmul.mubr.f32.gmra.mrb[0].mxu0 %v559
    %v561 = vpop.f32.mrb[0].mxu0
    %v562 = vadd.f32 %v418, %v561
    %v563 = vpop.f32.mrb[0].mxu0
    %564 = vmatprep.mubr.f32.mxu0 0.0
    %v565 = vand.u32 %v100, 4294901760
    %v566 = vsub.f32 %v100, %v565
    %567 = vmatmul.mubr.f32.gmra.mrb[0].mxu0 %v566
    %v568 = vpop.f32.mrb[0].mxu0
    %v569 = vadd.f32 %v424, %v568
    %v570 = vpop.f32.mrb[0].mxu0
    %571 = vmatprep.mubr.f32.mxu0 0.0
    %v572 = vand.u32 %v103, 4294901760
    %v573 = vsub.f32 %v103, %v572
    %574 = vmatmul.mubr.f32.gmra.mrb[0].mxu0 %v573
    %v575 = vpop.f32.mrb[0].mxu0
    %v576 = vadd.f32 %v430, %v575
    %v577 = vpop.f32.mrb[0].mxu0
    %578 = vdwg.mxu0
    %579 = vmatprep.subr.mxu0 0.0
    %v580 = vand.u32 %v34, 4294901760
    %581 = vmatpush1.msra.mxu0 %v580
    %582 = vmatprep.subr.mxu0 0.0
    %v583 = vand.u32 %v35, 4294901760
    %584 = vmatpush1.msra.mxu0 %v583
    %585 = vmatprep.subr.mxu0 0.0
    %v586 = vand.u32 %v36, 4294901760
    %587 = vmatpush1.msra.mxu0 %v586
    %588 = vmatprep.subr.mxu0 0.0
    %v589 = vand.u32 %v37, 4294901760
    %590 = vmatpush1.msra.mxu0 %v589
    %591 = vmatprep.subr.mxu0 0.0
    %v592 = vand.u32 %v38, 4294901760
    %593 = vmatpush1.msra.mxu0 %v592
    %594 = vmatprep.subr.mxu0 0.0
    %v595 = vand.u32 %v39, 4294901760
    %596 = vmatpush1.msra.mxu0 %v595
    %597 = vmatprep.subr.mxu0 0.0
    %v598 = vand.u32 %v40, 4294901760
    %599 = vmatpush1.msra.mxu0 %v598
    %600 = vmatprep.subr.mxu0 0.0
    %v601 = vand.u32 %v41, 4294901760
    %602 = vmatpush1.msra.mxu0 %v601
    %603 = vmatprep.subr.mxu0 0.0
    %v604 = vand.u32 %v42, 4294901760
    %605 = vmatpush1.msra.mxu0 %v604
    %606 = vmatprep.subr.mxu0 0.0
    %607 = vmatpush1.msra.mxu0 0.0
    %608 = vmatprep.subr.mxu0 0.0
    %609 = vmatpush1.msra.mxu0 0.0
    %610 = vmatprep.subr.mxu0 0.0
    %611 = vmatpush1.msra.mxu0 0.0
    %612 = vmatprep.subr.mxu0 0.0
    %613 = vmatpush1.msra.mxu0 0.0
    %614 = vmatprep.subr.mxu0 0.0
    %615 = vmatpush1.msra.mxu0 0.0
    %616 = vmatprep.subr.mxu0 0.0
    %617 = vmatpush1.msra.mxu0 0.0
    %618 = vmatprep.subr.mxu0 0.0
    %619 = vmatpush1.msra.mxu0 0.0
    %620 = vmatprep.subr.mxu0 0.0
    %621 = vmatpush1.msra.mxu0 0.0
    %622 = vmatprep.subr.mxu0 0.0
    %623 = vmatpush1.msra.mxu0 0.0
    %624 = vmatprep.subr.mxu0 0.0
    %625 = vmatpush1.msra.mxu0 0.0
    %626 = vmatprep.subr.mxu0 0.0
    %627 = vmatpush1.msra.mxu0 0.0
    %628 = vmatprep.subr.mxu0 0.0
    %629 = vmatpush1.msra.mxu0 0.0
    %630 = vmatprep.subr.mxu0 0.0
    %631 = vmatpush1.msra.mxu0 0.0
    %632 = vmatprep.subr.mxu0 0.0
    %633 = vmatpush1.msra.mxu0 0.0
    %634 = vmatprep.subr.mxu0 0.0
    %635 = vmatpush1.msra.mxu0 0.0
    %636 = vmatprep.subr.mxu0 0.0
    %637 = vmatpush1.msra.mxu0 0.0
    %638 = vmatprep.subr.mxu0 0.0
    %639 = vmatpush1.msra.mxu0 0.0
    %640 = vmatprep.subr.mxu0 0.0
    %641 = vmatpush1.msra.mxu0 0.0
    %642 = vmatprep.subr.mxu0 0.0
    %643 = vmatpush1.msra.mxu0 0.0
    %644 = vmatprep.subr.mxu0 0.0
    %645 = vmatpush1.msra.mxu0 0.0
    %646 = vmatprep.subr.mxu0 0.0
    %647 = vmatpush1.msra.mxu0 0.0
    %648 = vmatprep.subr.mxu0 0.0
    %649 = vmatpush1.msra.mxu0 0.0
    %650 = vmatprep.subr.mxu0 0.0
    %651 = vmatpush1.msra.mxu0 0.0
    %652 = vmatprep.mubr.f32.mxu0 0.0
    %v653 = vand.u32 %v79, 4294901760
    %v654 = vsub.f32 %v79, %v653
    %v655 = vand.u32 %v654, 4294901760
    %656 = vmatmul.mubr.f32.gmra.mrb[0].mxu0 %v655
    %v657 = vpop.f32.mrb[0].mxu0
    %v658 = vadd.f32 %v520, %v657
    %v659 = vpop.f32.mrb[0].mxu0
    %660 = vmatprep.mubr.f32.mxu0 0.0
    %v661 = vand.u32 %v82, 4294901760
    %v662 = vsub.f32 %v82, %v661
    %v663 = vand.u32 %v662, 4294901760
    %664 = vmatmul.mubr.f32.gmra.mrb[0].mxu0 %v663
    %v665 = vpop.f32.mrb[0].mxu0
    %v666 = vadd.f32 %v527, %v665
    %v667 = vpop.f32.mrb[0].mxu0
    %668 = vmatprep.mubr.f32.mxu0 0.0
    %v669 = vand.u32 %v85, 4294901760
    %v670 = vsub.f32 %v85, %v669
    %v671 = vand.u32 %v670, 4294901760
    %672 = vmatmul.mubr.f32.gmra.mrb[0].mxu0 %v671
    %v673 = vpop.f32.mrb[0].mxu0
    %v674 = vadd.f32 %v534, %v673
    %v675 = vpop.f32.mrb[0].mxu0
    %676 = vmatprep.mubr.f32.mxu0 0.0
    %v677 = vand.u32 %v88, 4294901760
    %v678 = vsub.f32 %v88, %v677
    %v679 = vand.u32 %v678, 4294901760
    %680 = vmatmul.mubr.f32.gmra.mrb[0].mxu0 %v679
    %v681 = vpop.f32.mrb[0].mxu0
    %v682 = vadd.f32 %v541, %v681
    %v683 = vpop.f32.mrb[0].mxu0
    %684 = vmatprep.mubr.f32.mxu0 0.0
    %v685 = vand.u32 %v91, 4294901760
    %v686 = vsub.f32 %v91, %v685
    %v687 = vand.u32 %v686, 4294901760
    %688 = vmatmul.mubr.f32.gmra.mrb[0].mxu0 %v687
    %v689 = vpop.f32.mrb[0].mxu0
    %v690 = vadd.f32 %v548, %v689
    %v691 = vpop.f32.mrb[0].mxu0
    %692 = vmatprep.mubr.f32.mxu0 0.0
    %v693 = vand.u32 %v94, 4294901760
    %v694 = vsub.f32 %v94, %v693
    %v695 = vand.u32 %v694, 4294901760
    %696 = vmatmul.mubr.f32.gmra.mrb[0].mxu0 %v695
    %v697 = vpop.f32.mrb[0].mxu0
    %v698 = vadd.f32 %v555, %v697
    %v699 = vpop.f32.mrb[0].mxu0
    %700 = vmatprep.mubr.f32.mxu0 0.0
    %v701 = vand.u32 %v97, 4294901760
    %v702 = vsub.f32 %v97, %v701
    %v703 = vand.u32 %v702, 4294901760
    %704 = vmatmul.mubr.f32.gmra.mrb[0].mxu0 %v703
    %v705 = vpop.f32.mrb[0].mxu0
    %v706 = vadd.f32 %v562, %v705
    %v707 = vpop.f32.mrb[0].mxu0
    %708 = vmatprep.mubr.f32.mxu0 0.0
    %v709 = vand.u32 %v100, 4294901760
    %v710 = vsub.f32 %v100, %v709
    %v711 = vand.u32 %v710, 4294901760
    %712 = vmatmul.mubr.f32.gmra.mrb[0].mxu0 %v711
    %v713 = vpop.f32.mrb[0].mxu0
    %v714 = vadd.f32 %v569, %v713
    %v715 = vpop.f32.mrb[0].mxu0
    %716 = vmatprep.mubr.f32.mxu0 0.0
    %v717 = vand.u32 %v103, 4294901760
    %v718 = vsub.f32 %v103, %v717
    %v719 = vand.u32 %v718, 4294901760
    %720 = vmatmul.mubr.f32.gmra.mrb[0].mxu0 %v719
    %v721 = vpop.f32.mrb[0].mxu0
    %v722 = vadd.f32 %v576, %v721
    %v723 = vpop.f32.mrb[0].mxu0
    %724 = vdwg.mxu0
    %725 = vmatprep.subr.mxu0 0.0
    %v726 = vand.u32 %v34, 4294901760
    %v727 = vsub.f32 %v34, %v726
    %v728 = vand.u32 %v727, 4294901760
    %729 = vmatpush1.msra.mxu0 %v728
    %730 = vmatprep.subr.mxu0 0.0
    %v731 = vand.u32 %v35, 4294901760
    %v732 = vsub.f32 %v35, %v731
    %v733 = vand.u32 %v732, 4294901760
    %734 = vmatpush1.msra.mxu0 %v733
    %735 = vmatprep.subr.mxu0 0.0
    %v736 = vand.u32 %v36, 4294901760
    %v737 = vsub.f32 %v36, %v736
    %v738 = vand.u32 %v737, 4294901760
    %739 = vmatpush1.msra.mxu0 %v738
    %740 = vmatprep.subr.mxu0 0.0
    %v741 = vand.u32 %v37, 4294901760
    %v742 = vsub.f32 %v37, %v741
    %v743 = vand.u32 %v742, 4294901760
    %744 = vmatpush1.msra.mxu0 %v743
    %745 = vmatprep.subr.mxu0 0.0
    %v746 = vand.u32 %v38, 4294901760
    %v747 = vsub.f32 %v38, %v746
    %v748 = vand.u32 %v747, 4294901760
    %749 = vmatpush1.msra.mxu0 %v748
    %750 = vmatprep.subr.mxu0 0.0
    %v751 = vand.u32 %v39, 4294901760
    %v752 = vsub.f32 %v39, %v751
    %v753 = vand.u32 %v752, 4294901760
    %754 = vmatpush1.msra.mxu0 %v753
    %755 = vmatprep.subr.mxu0 0.0
    %v756 = vand.u32 %v40, 4294901760
    %v757 = vsub.f32 %v40, %v756
    %v758 = vand.u32 %v757, 4294901760
    %759 = vmatpush1.msra.mxu0 %v758
    %760 = vmatprep.subr.mxu0 0.0
    %v761 = vand.u32 %v41, 4294901760
    %v762 = vsub.f32 %v41, %v761
    %v763 = vand.u32 %v762, 4294901760
    %764 = vmatpush1.msra.mxu0 %v763
    %765 = vmatprep.subr.mxu0 0.0
    %v766 = vand.u32 %v42, 4294901760
    %v767 = vsub.f32 %v42, %v766
    %v768 = vand.u32 %v767, 4294901760
    %769 = vmatpush1.msra.mxu0 %v768
    %770 = vmatprep.subr.mxu0 0.0
    %771 = vmatpush1.msra.mxu0 0.0
    %772 = vmatprep.subr.mxu0 0.0
    %773 = vmatpush1.msra.mxu0 0.0
    %774 = vmatprep.subr.mxu0 0.0
    %775 = vmatpush1.msra.mxu0 0.0
    %776 = vmatprep.subr.mxu0 0.0
    %777 = vmatpush1.msra.mxu0 0.0
    %778 = vmatprep.subr.mxu0 0.0
    %779 = vmatpush1.msra.mxu0 0.0
    %780 = vmatprep.subr.mxu0 0.0
    %781 = vmatpush1.msra.mxu0 0.0
    %782 = vmatprep.subr.mxu0 0.0
    %783 = vmatpush1.msra.mxu0 0.0
    %784 = vmatprep.subr.mxu0 0.0
    %785 = vmatpush1.msra.mxu0 0.0
    %786 = vmatprep.subr.mxu0 0.0
    %787 = vmatpush1.msra.mxu0 0.0
    %788 = vmatprep.subr.mxu0 0.0
    %789 = vmatpush1.msra.mxu0 0.0
    %790 = vmatprep.subr.mxu0 0.0
    %791 = vmatpush1.msra.mxu0 0.0
    %792 = vmatprep.subr.mxu0 0.0
    %793 = vmatpush1.msra.mxu0 0.0
    %794 = vmatprep.subr.mxu0 0.0
    %795 = vmatpush1.msra.mxu0 0.0
    %796 = vmatprep.subr.mxu0 0.0
    %797 = vmatpush1.msra.mxu0 0.0
    %798 = vmatprep.subr.mxu0 0.0
    %799 = vmatpush1.msra.mxu0 0.0
    %800 = vmatprep.subr.mxu0 0.0
    %801 = vmatpush1.msra.mxu0 0.0
    %802 = vmatprep.subr.mxu0 0.0
    %803 = vmatpush1.msra.mxu0 0.0
    %804 = vmatprep.subr.mxu0 0.0
    %805 = vmatpush1.msra.mxu0 0.0
    %806 = vmatprep.subr.mxu0 0.0
    %807 = vmatpush1.msra.mxu0 0.0
    %808 = vmatprep.subr.mxu0 0.0
    %809 = vmatpush1.msra.mxu0 0.0
    %810 = vmatprep.subr.mxu0 0.0
    %811 = vmatpush1.msra.mxu0 0.0
    %812 = vmatprep.subr.mxu0 0.0
    %813 = vmatpush1.msra.mxu0 0.0
    %814 = vmatprep.subr.mxu0 0.0
    %815 = vmatpush1.msra.mxu0 0.0
    %816 = vmatprep.mubr.f32.mxu0 0.0
    %v817 = vand.u32 %v79, 4294901760
    %818 = vmatmul.mubr.f32.gmra.mrb[0].mxu0 %v817
    %v819 = vpop.f32.mrb[0].mxu0
    %v820 = vadd.f32 %v658, %v819
    %v821 = vpop.f32.mrb[0].mxu0
    %822 = vmatprep.mubr.f32.mxu0 0.0
    %v823 = vand.u32 %v82, 4294901760
    %824 = vmatmul.mubr.f32.gmra.mrb[0].mxu0 %v823
    %v825 = vpop.f32.mrb[0].mxu0
    %v826 = vadd.f32 %v666, %v825
    %v827 = vpop.f32.mrb[0].mxu0
    %828 = vmatprep.mubr.f32.mxu0 0.0
    %v829 = vand.u32 %v85, 4294901760
    %830 = vmatmul.mubr.f32.gmra.mrb[0].mxu0 %v829
    %v831 = vpop.f32.mrb[0].mxu0
    %v832 = vadd.f32 %v674, %v831
    %v833 = vpop.f32.mrb[0].mxu0
    %834 = vmatprep.mubr.f32.mxu0 0.0
    %v835 = vand.u32 %v88, 4294901760
    %836 = vmatmul.mubr.f32.gmra.mrb[0].mxu0 %v835
    %v837 = vpop.f32.mrb[0].mxu0
    %v838 = vadd.f32 %v682, %v837
    %v839 = vpop.f32.mrb[0].mxu0
    %840 = vmatprep.mubr.f32.mxu0 0.0
    %v841 = vand.u32 %v91, 4294901760
    %842 = vmatmul.mubr.f32.gmra.mrb[0].mxu0 %v841
    %v843 = vpop.f32.mrb[0].mxu0
    %v844 = vadd.f32 %v690, %v843
    %v845 = vpop.f32.mrb[0].mxu0
    %846 = vmatprep.mubr.f32.mxu0 0.0
    %v847 = vand.u32 %v94, 4294901760
    %848 = vmatmul.mubr.f32.gmra.mrb[0].mxu0 %v847
    %v849 = vpop.f32.mrb[0].mxu0
    %v850 = vadd.f32 %v698, %v849
    %v851 = vpop.f32.mrb[0].mxu0
    %852 = vmatprep.mubr.f32.mxu0 0.0
    %v853 = vand.u32 %v97, 4294901760
    %854 = vmatmul.mubr.f32.gmra.mrb[0].mxu0 %v853
    %v855 = vpop.f32.mrb[0].mxu0
    %v856 = vadd.f32 %v706, %v855
    %v857 = vpop.f32.mrb[0].mxu0
    %858 = vmatprep.mubr.f32.mxu0 0.0
    %v859 = vand.u32 %v100, 4294901760
    %860 = vmatmul.mubr.f32.gmra.mrb[0].mxu0 %v859
    %v861 = vpop.f32.mrb[0].mxu0
    %v862 = vadd.f32 %v714, %v861
    %v863 = vpop.f32.mrb[0].mxu0
    %864 = vmatprep.mubr.f32.mxu0 0.0
    %v865 = vand.u32 %v103, 4294901760
    %866 = vmatmul.mubr.f32.gmra.mrb[0].mxu0 %v865
    %v867 = vpop.f32.mrb[0].mxu0
    %v868 = vadd.f32 %v722, %v867
    %v869 = vpop.f32.mrb[0].mxu0
    %870 = vdwg.mxu0
    %871 = vmatprep.subr.mxu0 0.0
    %v872 = vand.u32 %v34, 4294901760
    %873 = vmatpush1.msra.mxu0 %v872
    %874 = vmatprep.subr.mxu0 0.0
    %v875 = vand.u32 %v35, 4294901760
    %876 = vmatpush1.msra.mxu0 %v875
    %877 = vmatprep.subr.mxu0 0.0
    %v878 = vand.u32 %v36, 4294901760
    %879 = vmatpush1.msra.mxu0 %v878
    %880 = vmatprep.subr.mxu0 0.0
    %v881 = vand.u32 %v37, 4294901760
    %882 = vmatpush1.msra.mxu0 %v881
    %883 = vmatprep.subr.mxu0 0.0
    %v884 = vand.u32 %v38, 4294901760
    %885 = vmatpush1.msra.mxu0 %v884
    %886 = vmatprep.subr.mxu0 0.0
    %v887 = vand.u32 %v39, 4294901760
    %888 = vmatpush1.msra.mxu0 %v887
    %889 = vmatprep.subr.mxu0 0.0
    %v890 = vand.u32 %v40, 4294901760
    %891 = vmatpush1.msra.mxu0 %v890
    %892 = vmatprep.subr.mxu0 0.0
    %v893 = vand.u32 %v41, 4294901760
    %894 = vmatpush1.msra.mxu0 %v893
    %895 = vmatprep.subr.mxu0 0.0
    %v896 = vand.u32 %v42, 4294901760
    %897 = vmatpush1.msra.mxu0 %v896
    %898 = vmatprep.subr.mxu0 0.0
    %899 = vmatpush1.msra.mxu0 0.0
    %900 = vmatprep.subr.mxu0 0.0
    %901 = vmatpush1.msra.mxu0 0.0
    %902 = vmatprep.subr.mxu0 0.0
    %903 = vmatpush1.msra.mxu0 0.0
    %904 = vmatprep.subr.mxu0 0.0
    %905 = vmatpush1.msra.mxu0 0.0
    %906 = vmatprep.subr.mxu0 0.0
    %907 = vmatpush1.msra.mxu0 0.0
    %908 = vmatprep.subr.mxu0 0.0
    %909 = vmatpush1.msra.mxu0 0.0
    %910 = vmatprep.subr.mxu0 0.0
    %911 = vmatpush1.msra.mxu0 0.0
    %912 = vmatprep.subr.mxu0 0.0
    %913 = vmatpush1.msra.mxu0 0.0
    %914 = vmatprep.subr.mxu0 0.0
    %915 = vmatpush1.msra.mxu0 0.0
    %916 = vmatprep.subr.mxu0 0.0
    %917 = vmatpush1.msra.mxu0 0.0
    %918 = vmatprep.subr.mxu0 0.0
    %919 = vmatpush1.msra.mxu0 0.0
    %920 = vmatprep.subr.mxu0 0.0
    %921 = vmatpush1.msra.mxu0 0.0
    %922 = vmatprep.subr.mxu0 0.0
    %923 = vmatpush1.msra.mxu0 0.0
    %924 = vmatprep.subr.mxu0 0.0
    %925 = vmatpush1.msra.mxu0 0.0
    %926 = vmatprep.subr.mxu0 0.0
    %927 = vmatpush1.msra.mxu0 0.0
    %928 = vmatprep.subr.mxu0 0.0
    %929 = vmatpush1.msra.mxu0 0.0
    %930 = vmatprep.subr.mxu0 0.0
    %931 = vmatpush1.msra.mxu0 0.0
    %932 = vmatprep.subr.mxu0 0.0
    %933 = vmatpush1.msra.mxu0 0.0
    %934 = vmatprep.subr.mxu0 0.0
    %935 = vmatpush1.msra.mxu0 0.0
    %936 = vmatprep.subr.mxu0 0.0
    %937 = vmatpush1.msra.mxu0 0.0
    %938 = vmatprep.subr.mxu0 0.0
    %939 = vmatpush1.msra.mxu0 0.0
    %940 = vmatprep.subr.mxu0 0.0
    %941 = vmatpush1.msra.mxu0 0.0
    %942 = vmatprep.subr.mxu0 0.0
    %943 = vmatpush1.msra.mxu0 0.0
    %944 = vmatprep.mubr.f32.mxu0 0.0
    %v945 = vand.u32 %v79, 4294901760
    %946 = vmatmul.mubr.f32.gmra.mrb[0].mxu0 %v945
    %v947 = vpop.f32.mrb[0].mxu0
    %v948 = vadd.f32 %v820, %v947
    %v949 = vpop.f32.mrb[0].mxu0
    %950 = vmatprep.mubr.f32.mxu0 0.0
    %v951 = vand.u32 %v82, 4294901760
    %952 = vmatmul.mubr.f32.gmra.mrb[0].mxu0 %v951
    %v953 = vpop.f32.mrb[0].mxu0
    %v954 = vadd.f32 %v826, %v953
    %v955 = vpop.f32.mrb[0].mxu0
    %956 = vmatprep.mubr.f32.mxu0 0.0
    %v957 = vand.u32 %v85, 4294901760
    %958 = vmatmul.mubr.f32.gmra.mrb[0].mxu0 %v957
    %v959 = vpop.f32.mrb[0].mxu0
    %v960 = vadd.f32 %v832, %v959
    %v961 = vpop.f32.mrb[0].mxu0
    %962 = vmatprep.mubr.f32.mxu0 0.0
    %v963 = vand.u32 %v88, 4294901760
    %964 = vmatmul.mubr.f32.gmra.mrb[0].mxu0 %v963
    %v965 = vpop.f32.mrb[0].mxu0
    %v966 = vadd.f32 %v838, %v965
    %v967 = vpop.f32.mrb[0].mxu0
    %968 = vmatprep.mubr.f32.mxu0 0.0
    %v969 = vand.u32 %v91, 4294901760
    %970 = vmatmul.mubr.f32.gmra.mrb[0].mxu0 %v969
    %v971 = vpop.f32.mrb[0].mxu0
    %v972 = vadd.f32 %v844, %v971
    %v973 = vpop.f32.mrb[0].mxu0
    %974 = vmatprep.mubr.f32.mxu0 0.0
    %v975 = vand.u32 %v94, 4294901760
    %976 = vmatmul.mubr.f32.gmra.mrb[0].mxu0 %v975
    %v977 = vpop.f32.mrb[0].mxu0
    %v978 = vadd.f32 %v850, %v977
    %v979 = vpop.f32.mrb[0].mxu0
    %980 = vmatprep.mubr.f32.mxu0 0.0
    %v981 = vand.u32 %v97, 4294901760
    %982 = vmatmul.mubr.f32.gmra.mrb[0].mxu0 %v981
    %v983 = vpop.f32.mrb[0].mxu0
    %v984 = vadd.f32 %v856, %v983
    %v985 = vpop.f32.mrb[0].mxu0
    %986 = vmatprep.mubr.f32.mxu0 0.0
    %v987 = vand.u32 %v100, 4294901760
    %988 = vmatmul.mubr.f32.gmra.mrb[0].mxu0 %v987
    %v989 = vpop.f32.mrb[0].mxu0
    %v990 = vadd.f32 %v862, %v989
    %v991 = vpop.f32.mrb[0].mxu0
    %992 = vmatprep.mubr.f32.mxu0 0.0
    %v993 = vand.u32 %v103, 4294901760
    %994 = vmatmul.mubr.f32.gmra.mrb[0].mxu0 %v993
    %v995 = vpop.f32.mrb[0].mxu0
    %v996 = vadd.f32 %v868, %v995
    %v997 = vpop.f32.mrb[0].mxu0
    %998 = vdwg.mxu0
    %v999 = vmul.f32 %v948, %v948
    %v1000 = vmul.f32 %v954, %v954
    %v1001 = vmul.f32 %v960, %v960
    %v1002 = vmul.f32 %v966, %v966
    %v1003 = vmul.f32 %v972, %v972
    %v1004 = vmul.f32 %v978, %v978
    %v1005 = vadd.f32 %v999, %v1002
    %v1006 = vadd.f32 %v1000, %v1003
    %v1007 = vadd.f32 %v1001, %v1004
    %v1008 = vmul.f32 %v984, %v984
    %v1009 = vmul.f32 %v990, %v990
    %v1010 = vmul.f32 %v996, %v996
    %v1011 = vadd.f32 %v1005, %v1008
    %v1012 = vadd.f32 %v1006, %v1009
    %v1013 = vadd.f32 %v1007, %v1010
    %v1014 = vrsqrt.pop %v1011
    %v1015 = vmul.f32 %v1011, %v1014
    %vm1016 = vcmp.eq.f32.partialorder %v1011, inf
    %v1017 = vsel %vm1016, %v1011, %v1015
    %vm1018 = vcmp.eq.f32.partialorder %v1011, 0.0
    %v1019 = vand.u32 %v1011, 2147483648
    %v1020 = vsel %vm1018, %v1019, %v1017
    %v1021 = vrsqrt.pop %v1012
    %v1022 = vmul.f32 %v1012, %v1021
    %vm1023 = vcmp.eq.f32.partialorder %v1012, inf
    %v1024 = vsel %vm1023, %v1012, %v1022
    %vm1025 = vcmp.eq.f32.partialorder %v1012, 0.0
    %v1026 = vand.u32 %v1012, 2147483648
    %v1027 = vsel %vm1025, %v1026, %v1024
    %v1028 = vrsqrt.pop %v1013
    %v1029 = vmul.f32 %v1013, %v1028
    %vm1030 = vcmp.eq.f32.partialorder %v1013, inf
    %v1031 = vsel %vm1030, %v1013, %v1029
    %vm1032 = vcmp.eq.f32.partialorder %v1013, 0.0
    %v1033 = vand.u32 %v1013, 2147483648
    %v1034 = vsel %vm1032, %v1033, %v1031
    %v1035 = vlaneseq
    %v1036 = vshrl.u32 %v1035, 7
    %v1037 = vadd.s32 %v1036, 8
    %v1038 = vadd.s32 %v1036, 16
    %vm1039 = vcmp.lt.s32.totalorder %v1036, 8
    %vm1040 = vcmp.lt.s32.totalorder %v1037, 8
    %vm1041 = vcmp.lt.s32.totalorder %v1038, 8
    %vm1042 = vcmp.ge.s32.totalorder %v1036, 8
    %vm1043 = vcmp.ge.s32.totalorder %v1037, 8
    %vm1044 = vcmp.ge.s32.totalorder %v1038, 8
    %vm1045 = vcmp.lt.s32.totalorder %v1036, 23
    %vm1046 = vcmp.lt.s32.totalorder %v1037, 23
    %vm1047 = vcmp.lt.s32.totalorder %v1038, 23
    %vm1048 = vmand %vm1042, %vm1045
    %vm1049 = vmand %vm1043, %vm1046
    %vm1050 = vmand %vm1044, %vm1047
    %vm1051 = vcmp.lt.s32.totalorder %v1036, 17
    %vm1052 = vcmp.lt.s32.totalorder %v1037, 17
    %vm1053 = vcmp.lt.s32.totalorder %v1038, 17
    %1055 = vset.pattern.permute.xlu0 0
    %1056 = vperm.xlu0 %1055, %v58
    %v1057 = vpop.permute.xlu0 %1056
    %1060 = vset.pattern.permute.xlu0 0
    %1061 = vperm.xlu0 %1060, %v59
    %v1062 = vpop.permute.xlu0 %1061
    %1065 = vset.pattern.permute.xlu0 0
    %1066 = vperm.xlu0 %1065, %v60
    %v1067 = vpop.permute.xlu0 %1066
    %v1069 = vsub.f32 %v1020, %v1057
    %v1070 = vsub.f32 %v1027, %v1062
    %v1071 = vsub.f32 %v1034, %v1067
    %v1072 = vrcp.pop %v1020
    %v1073 = vrot.slane %v1072, 4
    %v1074 = vmul.f32 %v1020, %v1073
    %v1075 = vsub.f32 %v1074, 1.0
    %v1076 = vsel %vm1048, %v1020, 0.0
    %v1077 = vsel %vm1049, %v1027, 0.0
    %v1078 = vsel %vm1050, %v1034, 0.0
    %vm1079 = vcmask 64512
    %v1080 = vsel %vm1079, %v1076, 0.0
    %v1081 = vsel %vm1079, %v1077, 0.0
    %v1082 = vadd.f32 %v1080, %v1081
    %v1083 = vsel %vm1079, %v1078, 0.0
    %v1084 = vadd.f32 %v1082, %v1083
    %v1085 = vrot.slane %v1084, 4
    %v1086 = vadd.f32 %v1084, %v1085
    %v1087 = vrot.slane %v1086, 2
    %v1088 = vadd.f32 %v1086, %v1087
    %v1089 = vrot.slane %v1088, 1
    %v1090 = vadd.f32 %v1088, %v1089
    %v1091 = vmul.f32 %v1090, 0.06666667
    %v1092 = vrcp.pop %v1091
    %v1093 = vmul.f32 %v1020, %v1092
    %v1094 = vmul.f32 %v1027, %v1092
    %v1095 = vmul.f32 %v1034, %v1092
    %v1096 = vsub.f32 %v1093, 1.0
    %v1097 = vsub.f32 %v1094, 1.0
    %v1098 = vsub.f32 %v1095, 1.0
    %v1099 = vstv %s65
    %v1100 = vmul.f32 %v34, %v1099
    %v1101 = vmul.f32 %v35, %v1099
    %v1102 = vmul.f32 %v36, %v1099
    %v1103 = vstv %s66
    %v1104 = vmul.f32 %v37, %v1103
    %v1105 = vmul.f32 %v38, %v1103
    %v1106 = vmul.f32 %v39, %v1103
    %v1107 = vadd.f32 %v1100, %v1104
    %v1108 = vadd.f32 %v1101, %v1105
    %v1109 = vadd.f32 %v1102, %v1106
    %v1110 = vstv %s67
    %v1111 = vmul.f32 %v40, %v1110
    %v1112 = vmul.f32 %v41, %v1110
    %v1113 = vmul.f32 %v42, %v1110
    %v1114 = vadd.f32 %v1107, %v1111
    %v1115 = vadd.f32 %v1108, %v1112
    %v1116 = vadd.f32 %v1109, %v1113
    %v1117 = vstv %s68
    %v1118 = vadd.f32 %v1114, %v1117
    %v1119 = vadd.f32 %v1115, %v1117
    %v1120 = vadd.f32 %v1116, %v1117
    %v1121 = vstv %s69
    %v1122 = vmul.f32 %v34, %v1121
    %v1123 = vmul.f32 %v35, %v1121
    %v1124 = vmul.f32 %v36, %v1121
    %v1125 = vstv %s70
    %v1126 = vmul.f32 %v37, %v1125
    %v1127 = vmul.f32 %v38, %v1125
    %v1128 = vmul.f32 %v39, %v1125
    %v1129 = vadd.f32 %v1122, %v1126
    %v1130 = vadd.f32 %v1123, %v1127
    %v1131 = vadd.f32 %v1124, %v1128
    %v1132 = vstv %s71
    %v1133 = vmul.f32 %v40, %v1132
    %v1134 = vmul.f32 %v41, %v1132
    %v1135 = vmul.f32 %v42, %v1132
    %v1136 = vadd.f32 %v1129, %v1133
    %v1137 = vadd.f32 %v1130, %v1134
    %v1138 = vadd.f32 %v1131, %v1135
    %v1139 = vstv %s72
    %v1140 = vadd.f32 %v1136, %v1139
    %v1141 = vadd.f32 %v1137, %v1139
    %v1142 = vadd.f32 %v1138, %v1139
    %v1143 = vstv %s73
    %v1144 = vmul.f32 %v34, %v1143
    %v1145 = vmul.f32 %v35, %v1143
    %v1146 = vmul.f32 %v36, %v1143
    %v1147 = vstv %s74
    %v1148 = vmul.f32 %v37, %v1147
    %v1149 = vmul.f32 %v38, %v1147
    %v1150 = vmul.f32 %v39, %v1147
    %v1151 = vadd.f32 %v1144, %v1148
    %v1152 = vadd.f32 %v1145, %v1149
    %v1153 = vadd.f32 %v1146, %v1150
    %v1154 = vstv %s75
    %v1155 = vmul.f32 %v40, %v1154
    %v1156 = vmul.f32 %v41, %v1154
    %v1157 = vmul.f32 %v42, %v1154
    %v1158 = vadd.f32 %v1151, %v1155
    %v1159 = vadd.f32 %v1152, %v1156
    %v1160 = vadd.f32 %v1153, %v1157
    %v1161 = vstv %s76
    %v1162 = vadd.f32 %v1158, %v1161
    %v1163 = vadd.f32 %v1159, %v1161
    %v1164 = vadd.f32 %v1160, %v1161
    %v1165 = vstv %s63
    %v1166 = vsub.f32 %v43, %v1165
    %v1167 = vsub.f32 %v44, %v1165
    %v1168 = vsub.f32 %v45, %v1165
    %v1169 = vstv %s61
    %v1170 = vmul.f32 %v1166, %v1169
    %v1171 = vmul.f32 %v1167, %v1169
    %v1172 = vmul.f32 %v1168, %v1169
    %v1173 = vstv %s64
    %v1174 = vsub.f32 %v46, %v1173
    %v1175 = vsub.f32 %v47, %v1173
    %v1176 = vsub.f32 %v48, %v1173
    %v1177 = vstv %s62
    %v1178 = vmul.f32 %v1174, %v1177
    %v1179 = vmul.f32 %v1175, %v1177
    %v1180 = vmul.f32 %v1176, %v1177
    %v1181 = vmul.f32 %v1170, %v1162
    %v1182 = vmul.f32 %v1171, %v1163
    %v1183 = vmul.f32 %v1172, %v1164
    %v1184 = vsub.f32 %v1181, %v1118
    %v1185 = vsub.f32 %v1182, %v1119
    %v1186 = vsub.f32 %v1183, %v1120
    %v1187 = vmul.f32 %v1178, %v1162
    %v1188 = vmul.f32 %v1179, %v1163
    %v1189 = vmul.f32 %v1180, %v1164
    %v1190 = vsub.f32 %v1187, %v1140
    %v1191 = vsub.f32 %v1188, %v1141
    %v1192 = vsub.f32 %v1189, %v1142
    %v1193 = vmul.f32 %v1184, %v1184
    %v1194 = vmul.f32 %v1185, %v1185
    %v1195 = vmul.f32 %v1186, %v1186
    %v1196 = vmul.f32 %v1190, %v1190
    %v1197 = vmul.f32 %v1191, %v1191
    %v1198 = vmul.f32 %v1192, %v1192
    %v1199 = vadd.f32 %v1193, %v1196
    %v1200 = vadd.f32 %v1194, %v1197
    %v1201 = vadd.f32 %v1195, %v1198
    %v1202 = vrsqrt.pop %v1199
    %v1203 = vmul.f32 %v1199, %v1202
    %vm1204 = vcmp.eq.f32.partialorder %v1199, inf
    %v1205 = vsel %vm1204, %v1199, %v1203
    %vm1206 = vcmp.eq.f32.partialorder %v1199, 0.0
    %v1207 = vand.u32 %v1199, 2147483648
    %v1208 = vsel %vm1206, %v1207, %v1205
    %v1209 = vrsqrt.pop %v1200
    %v1210 = vmul.f32 %v1200, %v1209
    %vm1211 = vcmp.eq.f32.partialorder %v1200, inf
    %v1212 = vsel %vm1211, %v1200, %v1210
    %vm1213 = vcmp.eq.f32.partialorder %v1200, 0.0
    %v1214 = vand.u32 %v1200, 2147483648
    %v1215 = vsel %vm1213, %v1214, %v1212
    %v1216 = vrsqrt.pop %v1201
    %v1217 = vmul.f32 %v1201, %v1216
    %vm1218 = vcmp.eq.f32.partialorder %v1201, inf
    %v1219 = vsel %vm1218, %v1201, %v1217
    %vm1220 = vcmp.eq.f32.partialorder %v1201, 0.0
    %v1221 = vand.u32 %v1201, 2147483648
    %v1222 = vsel %vm1220, %v1221, %v1219
    %v1223 = vmul.f32 %v1170, %v1170
    %v1224 = vmul.f32 %v1171, %v1171
    %v1225 = vmul.f32 %v1172, %v1172
    %v1226 = vmul.f32 %v1178, %v1178
    %v1227 = vmul.f32 %v1179, %v1179
    %v1228 = vmul.f32 %v1180, %v1180
    %v1229 = vadd.f32 %v1223, %v1226
    %v1230 = vadd.f32 %v1224, %v1227
    %v1231 = vadd.f32 %v1225, %v1228
    %v1232 = vadd.f32 %v1229, 1.0
    %v1233 = vadd.f32 %v1230, 1.0
    %v1234 = vadd.f32 %v1231, 1.0
    %v1235 = vmul.f32 %v1118, %v1118
    %v1236 = vmul.f32 %v1119, %v1119
    %v1237 = vmul.f32 %v1120, %v1120
    %v1238 = vmul.f32 %v1140, %v1140
    %v1239 = vmul.f32 %v1141, %v1141
    %v1240 = vmul.f32 %v1142, %v1142
    %v1241 = vadd.f32 %v1235, %v1238
    %v1242 = vadd.f32 %v1236, %v1239
    %v1243 = vadd.f32 %v1237, %v1240
    %v1244 = vmul.f32 %v1162, %v1162
    %v1245 = vmul.f32 %v1163, %v1163
    %v1246 = vmul.f32 %v1164, %v1164
    %v1247 = vadd.f32 %v1241, %v1244
    %v1248 = vadd.f32 %v1242, %v1245
    %v1249 = vadd.f32 %v1243, %v1246
    %v1250 = vmul.f32 %v1232, %v1247
    %v1251 = vmul.f32 %v1233, %v1248
    %v1252 = vmul.f32 %v1234, %v1249
    %v1253 = vrsqrt.pop %v1250
    %v1254 = vrsqrt.pop %v1251
    %v1255 = vrsqrt.pop %v1252
    %v1256 = vmul.f32 %v1208, %v1253
    %v1257 = vmul.f32 %v1215, %v1254
    %v1258 = vmul.f32 %v1222, %v1255
    %v1259 = vmul.f32 %v1069, %v1069
    %v1260 = vmul.f32 %v1070, %v1070
    %v1261 = vmul.f32 %v1071, %v1071
    %v1262 = vsel %vm1039, %v1259, 0.0
    %v1263 = vsel %vm1040, %v1260, 0.0
    %v1264 = vsel %vm1041, %v1261, 0.0
    %v1265 = vmul.f32 %v1262, 0.015625
    %v1266 = vmul.f32 %v1263, 0.015625
    %v1267 = vmul.f32 %v1264, 0.015625
    %v1268 = vmul.f32 %v1096, %v1096
    %v1269 = vmul.f32 %v1097, %v1097
    %v1270 = vmul.f32 %v1098, %v1098
    %v1271 = vsel %vm1048, %v1268, 0.0
    %v1272 = vsel %vm1049, %v1269, 0.0
    %v1273 = vsel %vm1050, %v1270, 0.0
    %v1274 = vmul.f32 %v1271, 1.6666667e-05
    %v1275 = vmul.f32 %v1272, 1.6666667e-05
    %v1276 = vmul.f32 %v1273, 1.6666667e-05
    %v1277 = vadd.f32 %v1265, %v1274
    %v1278 = vadd.f32 %v1266, %v1275
    %v1279 = vadd.f32 %v1267, %v1276
    %v1280 = vsel %vm1051, %v1256, 0.0
    %v1281 = vsel %vm1052, %v1257, 0.0
    %v1282 = vsel %vm1053, %v1258, 0.0
    %v1283 = vmul.f32 %v1280, 0.073529415
    %v1284 = vmul.f32 %v1281, 0.073529415
    %v1285 = vmul.f32 %v1282, 0.073529415
    %v1286 = vadd.f32 %v1277, %v1283
    %v1287 = vadd.f32 %v1278, %v1284
    %v1288 = vadd.f32 %v1279, %v1285
    %v1289 = vsel %vm1079, %v1286, 0.0
    %v1290 = vsel %vm1079, %v1287, 0.0
    %v1291 = vadd.f32 %v1289, %v1290
    %v1292 = vsel %vm1079, %v1288, 0.0
    %v1293 = vadd.f32 %v1291, %v1292
    %1294 = vadd.xlane.f32.xlu0 %v1293
    %v1295 = vpop.xlane.xlu0 %1294
    %v1296 = vrot.slane %v1295, 4
    %v1297 = vadd.f32 %v1295, %v1296
    %v1298 = vrot.slane %v1297, 2
    %v1299 = vadd.f32 %v1297, %v1298
    %v1300 = vrot.slane %v1299, 1
    %v1301 = vadd.f32 %v1299, %v1300
    %s1302 = vtos %v1301
    %v1303 = vmul.f32 %v1075, %v1075
    %v1304 = vsel %vm1079, %v1303, 0.0
    %1305 = vadd.xlane.f32.xlu0 %v1304
    %v1306 = vpop.xlane.xlu0 %1305
    %v1307 = vrot.slane %v1306, 4
    %v1308 = vadd.f32 %v1306, %v1307
    %v1309 = vrot.slane %v1308, 2
    %v1310 = vadd.f32 %v1308, %v1309
    %v1311 = vrot.slane %v1310, 1
    %v1312 = vadd.f32 %v1310, %v1311
    %s1313 = vtos %v1312
    %s1314 = smul.f32 %s1313, 3.125e-05
    %s1315 = sadd.f32 %s1302, %s1314
    %v1316 = vmul.f32 %v34, 0.5
    %v1317 = vmul.f32 %v35, 0.5
    %v1318 = vmul.f32 %v36, 0.5
    %v1319 = vmul.f32 %v37, 0.5
    %v1320 = vmul.f32 %v38, 0.5
    %v1321 = vmul.f32 %v39, 0.5
    %v1322 = vmul.f32 %v40, 0.5
    %v1323 = vmul.f32 %v41, 0.5
    %v1324 = vmul.f32 %v42, 0.5
    %1334 = vrot.lane.b32.xlu0 %v34, 127
    %v1335 = vpop.permute.xlu0 %1334
    %1336 = vrot.lane.b32.xlu0 %v35, 127
    %v1337 = vpop.permute.xlu0 %1336
    %1338 = vrot.lane.b32.xlu0 %v36, 127
    %v1339 = vpop.permute.xlu0 %1338
    %1340 = vrot.lane.b32.xlu0 %v37, 127
    %v1341 = vpop.permute.xlu0 %1340
    %1342 = vrot.lane.b32.xlu0 %v38, 127
    %v1343 = vpop.permute.xlu0 %1342
    %1344 = vrot.lane.b32.xlu0 %v39, 127
    %v1345 = vpop.permute.xlu0 %1344
    %1346 = vrot.lane.b32.xlu0 %v40, 127
    %v1347 = vpop.permute.xlu0 %1346
    %1348 = vrot.lane.b32.xlu0 %v41, 127
    %v1349 = vpop.permute.xlu0 %1348
    %1350 = vrot.lane.b32.xlu0 %v42, 127
    %v1351 = vpop.permute.xlu0 %1350
    %v1361 = vsub.f32 %v1316, %v1335
    %v1362 = vsub.f32 %v1317, %v1337
    %v1363 = vsub.f32 %v1318, %v1339
    %v1364 = vsub.f32 %v1319, %v1341
    %v1365 = vsub.f32 %v1320, %v1343
    %v1366 = vsub.f32 %v1321, %v1345
    %v1367 = vsub.f32 %v1322, %v1347
    %v1368 = vsub.f32 %v1323, %v1349
    %v1369 = vsub.f32 %v1324, %v1351
    %1379 = vrot.lane.b32.xlu0 %v1316, 126
    %v1380 = vpop.permute.xlu0 %1379
    %1381 = vrot.lane.b32.xlu0 %v1317, 126
    %v1382 = vpop.permute.xlu0 %1381
    %1383 = vrot.lane.b32.xlu0 %v1318, 126
    %v1384 = vpop.permute.xlu0 %1383
    %1385 = vrot.lane.b32.xlu0 %v1319, 126
    %v1386 = vpop.permute.xlu0 %1385
    %1387 = vrot.lane.b32.xlu0 %v1320, 126
    %v1388 = vpop.permute.xlu0 %1387
    %1389 = vrot.lane.b32.xlu0 %v1321, 126
    %v1390 = vpop.permute.xlu0 %1389
    %1391 = vrot.lane.b32.xlu0 %v1322, 126
    %v1392 = vpop.permute.xlu0 %1391
    %1393 = vrot.lane.b32.xlu0 %v1323, 126
    %v1394 = vpop.permute.xlu0 %1393
    %1395 = vrot.lane.b32.xlu0 %v1324, 126
    %v1396 = vpop.permute.xlu0 %1395
    %v1406 = vadd.f32 %v1361, %v1380
    %v1407 = vadd.f32 %v1362, %v1382
    %v1408 = vadd.f32 %v1363, %v1384
    %v1409 = vadd.f32 %v1364, %v1386
    %v1410 = vadd.f32 %v1365, %v1388
    %v1411 = vadd.f32 %v1366, %v1390
    %v1412 = vadd.f32 %v1367, %v1392
    %v1413 = vadd.f32 %v1368, %v1394
    %v1414 = vadd.f32 %v1369, %v1396
    %v1415 = vmul.f32 %v1406, %v1406
    %v1416 = vmul.f32 %v1407, %v1407
    %v1417 = vmul.f32 %v1408, %v1408
    %v1418 = vmul.f32 %v1409, %v1409
    %v1419 = vmul.f32 %v1410, %v1410
    %v1420 = vmul.f32 %v1411, %v1411
    %v1421 = vmul.f32 %v1412, %v1412
    %v1422 = vmul.f32 %v1413, %v1413
    %v1423 = vmul.f32 %v1414, %v1414
    %vm1424 = vcmask 48128
    %v1425 = vsel %vm1424, %v1415, 0.0
    %v1426 = vsel %vm1424, %v1416, 0.0
    %v1427 = vadd.f32 %v1425, %v1426
    %v1428 = vsel %vm1424, %v1417, 0.0
    %v1429 = vadd.f32 %v1427, %v1428
    %v1430 = vsel %vm1424, %v1418, 0.0
    %v1431 = vadd.f32 %v1429, %v1430
    %v1432 = vsel %vm1424, %v1419, 0.0
    %v1433 = vadd.f32 %v1431, %v1432
    %v1434 = vsel %vm1424, %v1420, 0.0
    %v1435 = vadd.f32 %v1433, %v1434
    %v1436 = vsel %vm1424, %v1421, 0.0
    %v1437 = vadd.f32 %v1435, %v1436
    %v1438 = vsel %vm1424, %v1422, 0.0
    %v1439 = vadd.f32 %v1437, %v1438
    %v1440 = vsel %vm1424, %v1423, 0.0
    %v1441 = vadd.f32 %v1439, %v1440
    %1442 = vadd.xlane.f32.xlu0 %v1441
    %v1443 = vpop.xlane.xlu0 %1442
    %v1444 = vrot.slane %v1443, 4
    %v1445 = vadd.f32 %v1443, %v1444
    %v1446 = vrot.slane %v1445, 2
    %v1447 = vadd.f32 %v1445, %v1446
    %v1448 = vrot.slane %v1447, 1
    %v1449 = vadd.f32 %v1447, %v1448
    %s1450 = vtos %v1449
    %s1451 = smul.f32 %s1450, 0.0003267974
    %s1452 = sadd.f32 %s1315, %s1451
    %s1453 = scalar_lea.smem [#allocation5], 0
    %1454 = sst [smem:[%s1453]] %s1452
    // Predicated region
    $region26: #{tpu_custom_call.1} parent=1 // pred_check
      _
    $region27: #{tpu_custom_call.1} parent=1 // pred_check_branch
      %1456 = sbr.rel (0) target = $region29
    $region28: #{tpu_custom_call.1} parent=1 // pred_region
      %s1458 = ssub.s32 16, 16
      %1459 = vsyncadd [#allocation3], %s1458
      %1462 = dma.smem_to_hbm [#allocation5], 16, %s5, [#allocation3]
    $region29: #{tpu_custom_call.1} parent=1 // pred_fallthru
      _
    // Predicated region
    $region30: #{tpu_custom_call.1} parent=1 // pred_check
      _
    $region31: #{tpu_custom_call.1} parent=1 // pred_check_branch
      %1464 = sbr.rel (0) target = $region33
    $region32: #{tpu_custom_call.1} parent=1 // pred_region
      %1465 = dma.done [#allocation3], 16
    $region33: #{tpu_custom_call.1} parent=1 // pred_fallthru
      _
    %1466 = sfence
    %1467 = vsyncpa [#allocation3], 1
    %1468 = vsyncpa [#allocation4], 1

</llo_original>
